<compile_context>
chip_gen: v7x
topology: tpu7x:2x2x1
jax: 0.10.0
libtpu: 0.0.40
codegen_flags: <defaults>
</compile_context>

<pallas_src>
import numpy as np
import jax
import jax.numpy as jnp
from jax import lax
from jax.experimental import pallas as pl
from jax.experimental.pallas import tpu as pltpu


def lstm_attn_kernel(x_ref, w_ih_ref, w_hh_ref, b_ref,
                     w_attn_ref, b_attn_ref, w_fc_ref, b_fc_ref,
                     out_ref, gx_ref, hs_ref):
    """x_ref: (T, TB, D) time-major block of the batch.
       out_ref: (TB, L) packed lane-dense slab: [out_dim | T attn weights | pad].
       gx_ref: VMEM scratch (T, TB, 4H)  -- hoisted input projection.
       hs_ref: VMEM scratch (T, TB, H)   -- per-step hidden states."""
    T, TB, D = x_ref.shape
    H = w_hh_ref.shape[0]
    out_dim = w_fc_ref.shape[1]
    L = out_ref.shape[1]

    # ---- hoisted input projection: D broadcast FMAs on the VPU --------------
    # (no sublane concat, no lane-sparse K=D MXU pass)
    x = x_ref[...]                                    # (T, TB, D)
    w_ih = w_ih_ref[...]                              # (D, 4H)
    gx = x[..., 0:1] * w_ih[0:1, :] + b_ref[...]      # (T, TB, 4H)
    for d in range(1, D):
        gx = gx + x[..., d:d + 1] * w_ih[d:d + 1, :]
    gx_ref[...] = gx

    # ---- recurrence: h, c live in vregs; loop fully unrolled (static T) -----
    w_hh_bf16 = w_hh_ref[...].astype(jnp.bfloat16)    # cast ONCE, reused every step
    w_attn = w_attn_ref[...]                          # (1, H)
    b_attn = b_attn_ref[...]                          # (1, 1)

    h = jnp.zeros((TB, H), jnp.float32)
    c = jnp.zeros((TB, H), jnp.float32)
    scores = []                                       # T x (TB, 1)
    for t in range(T):
        # serialized critical path: bf16 operands, f32 accumulation on the MXU
        gates = gx_ref[t] + jnp.dot(h.astype(jnp.bfloat16), w_hh_bf16,
                                    preferred_element_type=jnp.float32)  # (TB, 4H)
        # one full-row sigmoid pass; tanh only over the g-gate lanes
        sig = jax.nn.sigmoid(gates)
        i_g = sig[:, 0 * H:1 * H]
        f_g = sig[:, 1 * H:2 * H]
        g_g = jnp.tanh(gates[:, 2 * H:3 * H])
        o_g = sig[:, 3 * H:4 * H]
        c = f_g * c + i_g * g_g
        h = o_g * jnp.tanh(c)
        hs_ref[t] = h                                 # park h in VMEM scratch
        # attention score while h is still in vregs
        scores.append(jnp.sum(h * w_attn, axis=-1, keepdims=True) + b_attn)

    # ---- softmax over time: ONE lane-dense (TB, T) row -----------------------
    s = jnp.concatenate(scores, axis=1)               # (TB, T)
    m = jnp.max(s, axis=-1, keepdims=True)            # one XLU reduce
    e = jnp.exp(s - m)                                # ONE EUP pass
    denom = jnp.sum(e, axis=-1, keepdims=True)        # one XLU reduce
    w = e / denom                                     # exact: weights sum to 1

    # ---- attention-weighted sum of hidden states + final FC -----------------
    applied = w[:, 0:1] * hs_ref[0]
    for t in range(1, T):
        applied = applied + w[:, t:t + 1] * hs_ref[t]                 # (TB, H)

    out_row = (jnp.dot(applied, w_fc_ref[...],
                       preferred_element_type=jnp.float32)
               + b_fc_ref[...])                                       # (TB, out_dim)

    # single lane-dense packed store: [output | attn weights | zero pad]
    pieces = [out_row, w]
    pad_w = L - out_dim - T
    if pad_w > 0:
        pieces.append(jnp.zeros((TB, pad_w), jnp.float32))
    out_ref[...] = jnp.concatenate(pieces, axis=1)                    # (TB, L)


def _pick_block_b(B):
    """Largest batch block in {256,...,8} that divides B with >= 2 grid steps
    (so the 'parallel' axis can shard across v7x's 2 TensorCores); whole batch
    for tiny B."""
    if B <= 16:
        return B
    for cand in (256, 128, 64, 32, 16, 8):
        if B % cand == 0 and B // cand >= 2:
            return cand
    return B


def lstm_with_attention(x, params):
    """x: (B, T, D) float32 -> (output (B, out_dim), attn_weights (B, T, 1))."""
    B, T, D = x.shape
    H = params["w_hh_t"].shape[0]
    out_dim = params["w_fc_t"].shape[1]

    block_b = _pick_block_b(B)
    assert B % block_b == 0
    grid = (B // block_b,)

    # packed output width: lane-dense multiple of 128
    L = ((out_dim + T + 127) // 128) * 128

    x_tm = jnp.transpose(x, (1, 0, 2))                                # (T, B, D)

    packed = pl.pallas_call(
        lstm_attn_kernel,
        out_shape=jax.ShapeDtypeStruct((B, L), jnp.float32),
        grid=grid,
        in_specs=[
            pl.BlockSpec((T, block_b, D), lambda b: (0, b, 0)),       # x (time-major)
            pl.BlockSpec((D, 4 * H), lambda b: (0, 0)),               # W_ih^T
            pl.BlockSpec((H, 4 * H), lambda b: (0, 0)),               # W_hh^T
            pl.BlockSpec((1, 4 * H), lambda b: (0, 0)),               # b_ih + b_hh
            pl.BlockSpec((1, H), lambda b: (0, 0)),                   # attention.weight
            pl.BlockSpec((1, 1), lambda b: (0, 0)),                   # attention.bias
            pl.BlockSpec((H, out_dim), lambda b: (0, 0)),             # fc.weight^T
            pl.BlockSpec((1, out_dim), lambda b: (0, 0)),             # fc.bias
        ],
        out_specs=pl.BlockSpec((block_b, L), lambda b: (b, 0)),
        scratch_shapes=[
            pltpu.VMEM((T, block_b, 4 * H), jnp.float32),             # gx
            pltpu.VMEM((T, block_b, H), jnp.float32),                 # hidden states
        ],
        compiler_params=pltpu.CompilerParams(
            dimension_semantics=("parallel",),      # shards batch on v7x megacore
            vmem_limit_bytes=32 * 1024 * 1024),
    )(x_tm, params["w_ih_t"], params["w_hh_t"], params["b_g"],
      params["w_attn_r"], params["b_attn_r"], params["w_fc_t"], params["b_fc_r"])

    out = packed[:, :out_dim]
    attn_weights = packed[:, out_dim:out_dim + T][:, :, None]         # (B, T, 1)
    return out, attn_weights


def init_params(key, input_dim=4, hidden_dim=32, output_dim=1):
    """Deterministic init following PyTorch's shapes / uniform(-1/sqrt(H), 1/sqrt(H))."""
    bound = 1.0 / np.sqrt(hidden_dim)
    ks = jax.random.split(key, 8)
    u = lambda kk, shape: jax.random.uniform(kk, shape, jnp.float32, -bound, bound)

    w_ih = u(ks[0], (4 * hidden_dim, input_dim))    # lstm.weight_ih_l0
    w_hh = u(ks[1], (4 * hidden_dim, hidden_dim))   # lstm.weight_hh_l0
    b_ih = u(ks[2], (4 * hidden_dim,))              # lstm.bias_ih_l0
    b_hh = u(ks[3], (4 * hidden_dim,))              # lstm.bias_hh_l0
    w_attn = u(ks[4], (1, hidden_dim))              # attention.weight
    b_attn = u(ks[5], (1,))                         # attention.bias
    w_fc = u(ks[6], (output_dim, hidden_dim))       # fc.weight
    b_fc = u(ks[7], (output_dim,))                  # fc.bias

    return dict(
        w_ih_t=w_ih.T,                              # (D, 4H)
        w_hh_t=w_hh.T,                              # (H, 4H)
        b_g=(b_ih + b_hh)[None, :],                 # (1, 4H)
        w_attn_r=w_attn,                            # (1, H)
        b_attn_r=b_attn.reshape(1, 1),              # (1, 1)
        w_fc_t=w_fc.T,                              # (H, out)
        b_fc_r=b_fc[None, :],                       # (1, out)
    )


def reference(x, p):
    """Pure-JAX f32 reference mirroring the PyTorch forward."""
    B, T, D = x.shape
    H = p["w_hh_t"].shape[0]

    def step(carry, x_t):
        h, c = carry
        gates = x_t @ p["w_ih_t"] + h @ p["w_hh_t"] + p["b_g"][0]
        i = jax.nn.sigmoid(gates[:, :H])
        f = jax.nn.sigmoid(gates[:, H:2 * H])
        g = jnp.tanh(gates[:, 2 * H:3 * H])
        o = jax.nn.sigmoid(gates[:, 3 * H:])
        c = f * c + i * g
        h = o * jnp.tanh(c)
        return (h, c), h

    init = (jnp.zeros((B, H), jnp.float32), jnp.zeros((B, H), jnp.float32))
    _, hs = lax.scan(step, init, jnp.transpose(x, (1, 0, 2)))
    lstm_out = jnp.transpose(hs, (1, 0, 2))                          # (B, T, H)

    scores = jnp.einsum("bth,h->bt", lstm_out, p["w_attn_r"][0]) + p["b_attn_r"][0, 0]
    attn = jax.nn.softmax(scores, axis=1)[:, :, None]                # (B, T, 1)
    applied = jnp.einsum("bt,bth->bh", attn[:, :, 0], lstm_out)      # (B, H)
    out = applied @ p["w_fc_t"] + p["b_fc_r"][0]
    return out, attn


if __name__ == "__main__":
    B, T, D, H, OUT = 2, 8, 4, 32, 1

    key = jax.random.PRNGKey(0)
    kx, kp = jax.random.split(key)
    x = jax.random.normal(kx, (B, T, D), jnp.float32)
    params = init_params(kp, input_dim=D, hidden_dim=H, output_dim=OUT)

    out, attn_w = jax.jit(lstm_with_attention)(x, params)
    out = jax.block_until_ready(out)
    attn_w = jax.block_until_ready(attn_w)

    ref_out, ref_attn = reference(x, params)
    # tolerance governed by the bf16 recurrent matmul (f32 accumulation)
    # compounding over the T serialized steps
    np.testing.assert_allclose(np.asarray(out), np.asarray(ref_out), atol=4e-3, rtol=4e-3)
    np.testing.assert_allclose(np.asarray(attn_w), np.asarray(ref_attn), atol=4e-3, rtol=4e-3)
    assert out.shape == (B, OUT) and attn_w.shape == (B, T, 1)

    print("KERNEL_OK")
</pallas_src>

<mosaic_0001>
module attributes {stable_mosaic.version = 11 : i64} {
  func.func @lstm_attn_kernel(%arg0: i32, %arg1: memref<8x2x4xf32, #tpu.memory_space<vmem>>, %arg2: memref<4x128xf32, #tpu.memory_space<vmem>>, %arg3: memref<32x128xf32, #tpu.memory_space<vmem>>, %arg4: memref<1x128xf32, #tpu.memory_space<vmem>>, %arg5: memref<1x32xf32, #tpu.memory_space<vmem>>, %arg6: memref<1x1xf32, #tpu.memory_space<vmem>>, %arg7: memref<32x1xf32, #tpu.memory_space<vmem>>, %arg8: memref<1x1xf32, #tpu.memory_space<vmem>>, %arg9: memref<2x128xf32, #tpu.memory_space<vmem>>, %arg10: memref<8x2x128xf32, #tpu.memory_space<vmem>>, %arg11: memref<8x2x32xf32, #tpu.memory_space<vmem>>) attributes {dimension_semantics = [#tpu.dimension_semantics<parallel>], iteration_bounds = array<i64: 1>, scalar_prefetch = 0 : i64, scratch_operands = 2 : i64, tpu.core_type = #tpu.core_type<tc>, window_params = [{transform_indices = @transform_0, window_bounds = array<i64: 8, 2, 4>}, {pipeline_mode = #tpu.pipeline_mode<synchronous>, transform_indices = @transform_1, window_bounds = array<i64: 4, 128>}, {pipeline_mode = #tpu.pipeline_mode<synchronous>, transform_indices = @transform_2, window_bounds = array<i64: 32, 128>}, {pipeline_mode = #tpu.pipeline_mode<synchronous>, transform_indices = @transform_3, window_bounds = array<i64: 1, 128>}, {pipeline_mode = #tpu.pipeline_mode<synchronous>, transform_indices = @transform_4, window_bounds = array<i64: 1, 32>}, {pipeline_mode = #tpu.pipeline_mode<synchronous>, transform_indices = @transform_5, window_bounds = array<i64: 1, 1>}, {pipeline_mode = #tpu.pipeline_mode<synchronous>, transform_indices = @transform_6, window_bounds = array<i64: 32, 1>}, {pipeline_mode = #tpu.pipeline_mode<synchronous>, transform_indices = @transform_7, window_bounds = array<i64: 1, 1>}, {transform_indices = @transform_8, window_bounds = array<i64: 2, 128>}]} {
    %c0 = arith.constant 0 : index
    %c0_0 = arith.constant 0 : index
    %c0_1 = arith.constant 0 : index
    %0 = vector.load %arg1[%c0, %c0_0, %c0_1] : memref<8x2x4xf32, #tpu.memory_space<vmem>>, vector<8x2x4xf32>
    %c0_2 = arith.constant 0 : index
    %c0_3 = arith.constant 0 : index
    %1 = vector.load %arg2[%c0_2, %c0_3] : memref<4x128xf32, #tpu.memory_space<vmem>>, vector<4x128xf32>
    %2 = vector.extract_strided_slice %0 {offsets = [0, 0, 0], sizes = [8, 2, 1], strides = [1, 1, 1]} : vector<8x2x4xf32> to vector<8x2x1xf32>
    %3 = vector.extract_strided_slice %1 {offsets = [0, 0], sizes = [1, 128], strides = [1, 1]} : vector<4x128xf32> to vector<1x128xf32>
    %4 = vector.shape_cast %3 : vector<1x128xf32> to vector<1x1x128xf32>
    %5 = vector.broadcast %2 : vector<8x2x1xf32> to vector<8x2x128xf32>
    %6 = vector.broadcast %4 : vector<1x1x128xf32> to vector<8x2x128xf32>
    %7 = arith.mulf %5, %6 : vector<8x2x128xf32>
    %c0_4 = arith.constant 0 : index
    %c0_5 = arith.constant 0 : index
    %8 = vector.load %arg4[%c0_4, %c0_5] : memref<1x128xf32, #tpu.memory_space<vmem>>, vector<1x128xf32>
    %9 = vector.shape_cast %8 : vector<1x128xf32> to vector<1x1x128xf32>
    %10 = vector.broadcast %9 : vector<1x1x128xf32> to vector<8x2x128xf32>
    %11 = arith.addf %7, %10 : vector<8x2x128xf32>
    %12 = vector.extract_strided_slice %0 {offsets = [0, 0, 1], sizes = [8, 2, 1], strides = [1, 1, 1]} : vector<8x2x4xf32> to vector<8x2x1xf32>
    %13 = vector.extract_strided_slice %1 {offsets = [1, 0], sizes = [1, 128], strides = [1, 1]} : vector<4x128xf32> to vector<1x128xf32>
    %14 = vector.shape_cast %13 : vector<1x128xf32> to vector<1x1x128xf32>
    %15 = vector.broadcast %12 : vector<8x2x1xf32> to vector<8x2x128xf32>
    %16 = vector.broadcast %14 : vector<1x1x128xf32> to vector<8x2x128xf32>
    %17 = arith.mulf %15, %16 : vector<8x2x128xf32>
    %18 = arith.addf %11, %17 : vector<8x2x128xf32>
    %19 = vector.extract_strided_slice %0 {offsets = [0, 0, 2], sizes = [8, 2, 1], strides = [1, 1, 1]} : vector<8x2x4xf32> to vector<8x2x1xf32>
    %20 = vector.extract_strided_slice %1 {offsets = [2, 0], sizes = [1, 128], strides = [1, 1]} : vector<4x128xf32> to vector<1x128xf32>
    %21 = vector.shape_cast %20 : vector<1x128xf32> to vector<1x1x128xf32>
    %22 = vector.broadcast %19 : vector<8x2x1xf32> to vector<8x2x128xf32>
    %23 = vector.broadcast %21 : vector<1x1x128xf32> to vector<8x2x128xf32>
    %24 = arith.mulf %22, %23 : vector<8x2x128xf32>
    %25 = arith.addf %18, %24 : vector<8x2x128xf32>
    %26 = vector.extract_strided_slice %0 {offsets = [0, 0, 3], sizes = [8, 2, 1], strides = [1, 1, 1]} : vector<8x2x4xf32> to vector<8x2x1xf32>
    %27 = vector.extract_strided_slice %1 {offsets = [3, 0], sizes = [1, 128], strides = [1, 1]} : vector<4x128xf32> to vector<1x128xf32>
    %28 = vector.shape_cast %27 : vector<1x128xf32> to vector<1x1x128xf32>
    %29 = vector.broadcast %26 : vector<8x2x1xf32> to vector<8x2x128xf32>
    %30 = vector.broadcast %28 : vector<1x1x128xf32> to vector<8x2x128xf32>
    %31 = arith.mulf %29, %30 : vector<8x2x128xf32>
    %32 = arith.addf %25, %31 : vector<8x2x128xf32>
    %c0_6 = arith.constant 0 : index
    %c0_7 = arith.constant 0 : index
    %c0_8 = arith.constant 0 : index
    %33 = vector.load %arg10[%c0_6, %c0_7, %c0_8] : memref<8x2x128xf32, #tpu.memory_space<vmem>>, vector<8x2x128xf32>
    tpu.vector_store %arg10[%c0_6, %c0_7, %c0_8], %32 {strides = array<i32>} : memref<8x2x128xf32, #tpu.memory_space<vmem>>, vector<8x2x128xf32>,
    %c0_9 = arith.constant 0 : index
    %c0_10 = arith.constant 0 : index
    %34 = vector.load %arg3[%c0_9, %c0_10] : memref<32x128xf32, #tpu.memory_space<vmem>>, vector<32x128xf32>
    %35 = arith.truncf %34 : vector<32x128xf32> to vector<32x128xbf16>
    %c0_11 = arith.constant 0 : index
    %c0_12 = arith.constant 0 : index
    %36 = vector.load %arg5[%c0_11, %c0_12] : memref<1x32xf32, #tpu.memory_space<vmem>>, vector<1x32xf32>
    %c0_13 = arith.constant 0 : index
    %c0_14 = arith.constant 0 : index
    %37 = vector.load %arg6[%c0_13, %c0_14] : memref<1x1xf32, #tpu.memory_space<vmem>>, vector<1x1xf32>
    %cst = arith.constant 0.000000e+00 : f32
    %38 = vector.broadcast %cst : f32 to vector<2x32xf32>
    %cst_15 = arith.constant 0.000000e+00 : f32
    %39 = vector.broadcast %cst_15 : f32 to vector<2x32xf32>
    %c0_16 = arith.constant 0 : index
    %c0_17 = arith.constant 0 : index
    %c0_18 = arith.constant 0 : index
    %40 = vector.load %arg10[%c0_16, %c0_17, %c0_18] : memref<8x2x128xf32, #tpu.memory_space<vmem>>, vector<1x2x128xf32>
    %41 = vector.shape_cast %40 : vector<1x2x128xf32> to vector<2x128xf32>
    %42 = arith.truncf %38 : vector<2x32xf32> to vector<2x32xbf16>
    %cst_19 = arith.constant dense<0.000000e+00> : vector<2x128xf32>
    %43 = tpu.matmul %42, %35, %cst_19 {dimension_numbers = #tpu.dot_dimension_numbers<[1], [0], [0], [1], [0, 0, 1, 1], [], []>} : vector<2x32xbf16>, vector<32x128xbf16>, vector<2x128xf32> -> vector<2x128xf32>
    %44 = arith.addf %41, %43 : vector<2x128xf32>
    %45 = arith.negf %44 : vector<2x128xf32>
    %46 = math.exp %45 : vector<2x128xf32>
    %cst_20 = arith.constant 1.000000e+00 : f32
    %47 = vector.broadcast %cst_20 : f32 to vector<2x128xf32>
    %48 = arith.addf %47, %46 : vector<2x128xf32>
    %49 = arith.divf %47, %48 : vector<2x128xf32>
    %50 = vector.extract_strided_slice %49 {offsets = [0, 0], sizes = [2, 32], strides = [1, 1]} : vector<2x128xf32> to vector<2x32xf32>
    %51 = vector.extract_strided_slice %49 {offsets = [0, 32], sizes = [2, 32], strides = [1, 1]} : vector<2x128xf32> to vector<2x32xf32>
    %52 = vector.extract_strided_slice %44 {offsets = [0, 64], sizes = [2, 32], strides = [1, 1]} : vector<2x128xf32> to vector<2x32xf32>
    %53 = math.tanh %52 : vector<2x32xf32>
    %54 = vector.extract_strided_slice %49 {offsets = [0, 96], sizes = [2, 32], strides = [1, 1]} : vector<2x128xf32> to vector<2x32xf32>
    %55 = arith.mulf %51, %39 : vector<2x32xf32>
    %56 = arith.mulf %50, %53 : vector<2x32xf32>
    %57 = arith.addf %55, %56 : vector<2x32xf32>
    %58 = math.tanh %57 : vector<2x32xf32>
    %59 = arith.mulf %54, %58 : vector<2x32xf32>
    %c0_21 = arith.constant 0 : index
    %c0_22 = arith.constant 0 : index
    %c0_23 = arith.constant 0 : index
    %60 = vector.load %arg11[%c0_21, %c0_22, %c0_23] : memref<8x2x32xf32, #tpu.memory_space<vmem>>, vector<1x2x32xf32>
    %61 = vector.shape_cast %60 : vector<1x2x32xf32> to vector<2x32xf32>
    %62 = vector.shape_cast %59 : vector<2x32xf32> to vector<1x2x32xf32>
    tpu.vector_store %arg11[%c0_21, %c0_22, %c0_23], %62 {strides = array<i32>} : memref<8x2x32xf32, #tpu.memory_space<vmem>>, vector<1x2x32xf32>,
    %63 = vector.broadcast %36 : vector<1x32xf32> to vector<2x32xf32>
    %64 = arith.mulf %59, %63 : vector<2x32xf32>
    %cst_24 = arith.constant dense<0.000000e+00> : vector<2xf32>
    %65 = vector.multi_reduction <add>, %64, %cst_24 [1] : vector<2x32xf32> to vector<2xf32>
    %66 = vector.shape_cast %65 : vector<2xf32> to vector<2x1xf32>
    %67 = vector.broadcast %37 : vector<1x1xf32> to vector<2x1xf32>
    %68 = arith.addf %66, %67 : vector<2x1xf32>
    %c1 = arith.constant 1 : index
    %c0_25 = arith.constant 0 : index
    %c0_26 = arith.constant 0 : index
    %69 = vector.load %arg10[%c1, %c0_25, %c0_26] : memref<8x2x128xf32, #tpu.memory_space<vmem>>, vector<1x2x128xf32>
    %70 = vector.shape_cast %69 : vector<1x2x128xf32> to vector<2x128xf32>
    %71 = arith.truncf %59 : vector<2x32xf32> to vector<2x32xbf16>
    %cst_27 = arith.constant dense<0.000000e+00> : vector<2x128xf32>
    %72 = tpu.matmul %71, %35, %cst_27 {dimension_numbers = #tpu.dot_dimension_numbers<[1], [0], [0], [1], [0, 0, 1, 1], [], []>} : vector<2x32xbf16>, vector<32x128xbf16>, vector<2x128xf32> -> vector<2x128xf32>
    %73 = arith.addf %70, %72 : vector<2x128xf32>
    %74 = arith.negf %73 : vector<2x128xf32>
    %75 = math.exp %74 : vector<2x128xf32>
    %cst_28 = arith.constant 1.000000e+00 : f32
    %76 = vector.broadcast %cst_28 : f32 to vector<2x128xf32>
    %77 = arith.addf %76, %75 : vector<2x128xf32>
    %78 = arith.divf %76, %77 : vector<2x128xf32>
    %79 = vector.extract_strided_slice %78 {offsets = [0, 0], sizes = [2, 32], strides = [1, 1]} : vector<2x128xf32> to vector<2x32xf32>
    %80 = vector.extract_strided_slice %78 {offsets = [0, 32], sizes = [2, 32], strides = [1, 1]} : vector<2x128xf32> to vector<2x32xf32>
    %81 = vector.extract_strided_slice %73 {offsets = [0, 64], sizes = [2, 32], strides = [1, 1]} : vector<2x128xf32> to vector<2x32xf32>
    %82 = math.tanh %81 : vector<2x32xf32>
    %83 = vector.extract_strided_slice %78 {offsets = [0, 96], sizes = [2, 32], strides = [1, 1]} : vector<2x128xf32> to vector<2x32xf32>
    %84 = arith.mulf %80, %57 : vector<2x32xf32>
    %85 = arith.mulf %79, %82 : vector<2x32xf32>
    %86 = arith.addf %84, %85 : vector<2x32xf32>
    %87 = math.tanh %86 : vector<2x32xf32>
    %88 = arith.mulf %83, %87 : vector<2x32xf32>
    %c1_29 = arith.constant 1 : index
    %c0_30 = arith.constant 0 : index
    %c0_31 = arith.constant 0 : index
    %89 = vector.load %arg11[%c1_29, %c0_30, %c0_31] : memref<8x2x32xf32, #tpu.memory_space<vmem>>, vector<1x2x32xf32>
    %90 = vector.shape_cast %89 : vector<1x2x32xf32> to vector<2x32xf32>
    %91 = vector.shape_cast %88 : vector<2x32xf32> to vector<1x2x32xf32>
    tpu.vector_store %arg11[%c1_29, %c0_30, %c0_31], %91 {strides = array<i32>} : memref<8x2x32xf32, #tpu.memory_space<vmem>>, vector<1x2x32xf32>,
    %92 = vector.broadcast %36 : vector<1x32xf32> to vector<2x32xf32>
    %93 = arith.mulf %88, %92 : vector<2x32xf32>
    %cst_32 = arith.constant dense<0.000000e+00> : vector<2xf32>
    %94 = vector.multi_reduction <add>, %93, %cst_32 [1] : vector<2x32xf32> to vector<2xf32>
    %95 = vector.shape_cast %94 : vector<2xf32> to vector<2x1xf32>
    %96 = vector.broadcast %37 : vector<1x1xf32> to vector<2x1xf32>
    %97 = arith.addf %95, %96 : vector<2x1xf32>
    %c2 = arith.constant 2 : index
    %c0_33 = arith.constant 0 : index
    %c0_34 = arith.constant 0 : index
    %98 = vector.load %arg10[%c2, %c0_33, %c0_34] : memref<8x2x128xf32, #tpu.memory_space<vmem>>, vector<1x2x128xf32>
    %99 = vector.shape_cast %98 : vector<1x2x128xf32> to vector<2x128xf32>
    %100 = arith.truncf %88 : vector<2x32xf32> to vector<2x32xbf16>
    %cst_35 = arith.constant dense<0.000000e+00> : vector<2x128xf32>
    %101 = tpu.matmul %100, %35, %cst_35 {dimension_numbers = #tpu.dot_dimension_numbers<[1], [0], [0], [1], [0, 0, 1, 1], [], []>} : vector<2x32xbf16>, vector<32x128xbf16>, vector<2x128xf32> -> vector<2x128xf32>
    %102 = arith.addf %99, %101 : vector<2x128xf32>
    %103 = arith.negf %102 : vector<2x128xf32>
    %104 = math.exp %103 : vector<2x128xf32>
    %cst_36 = arith.constant 1.000000e+00 : f32
    %105 = vector.broadcast %cst_36 : f32 to vector<2x128xf32>
    %106 = arith.addf %105, %104 : vector<2x128xf32>
    %107 = arith.divf %105, %106 : vector<2x128xf32>
    %108 = vector.extract_strided_slice %107 {offsets = [0, 0], sizes = [2, 32], strides = [1, 1]} : vector<2x128xf32> to vector<2x32xf32>
    %109 = vector.extract_strided_slice %107 {offsets = [0, 32], sizes = [2, 32], strides = [1, 1]} : vector<2x128xf32> to vector<2x32xf32>
    %110 = vector.extract_strided_slice %102 {offsets = [0, 64], sizes = [2, 32], strides = [1, 1]} : vector<2x128xf32> to vector<2x32xf32>
    %111 = math.tanh %110 : vector<2x32xf32>
    %112 = vector.extract_strided_slice %107 {offsets = [0, 96], sizes = [2, 32], strides = [1, 1]} : vector<2x128xf32> to vector<2x32xf32>
    %113 = arith.mulf %109, %86 : vector<2x32xf32>
    %114 = arith.mulf %108, %111 : vector<2x32xf32>
    %115 = arith.addf %113, %114 : vector<2x32xf32>
    %116 = math.tanh %115 : vector<2x32xf32>
    %117 = arith.mulf %112, %116 : vector<2x32xf32>
    %c2_37 = arith.constant 2 : index
    %c0_38 = arith.constant 0 : index
    %c0_39 = arith.constant 0 : index
    %118 = vector.load %arg11[%c2_37, %c0_38, %c0_39] : memref<8x2x32xf32, #tpu.memory_space<vmem>>, vector<1x2x32xf32>
    %119 = vector.shape_cast %118 : vector<1x2x32xf32> to vector<2x32xf32>
    %120 = vector.shape_cast %117 : vector<2x32xf32> to vector<1x2x32xf32>
    tpu.vector_store %arg11[%c2_37, %c0_38, %c0_39], %120 {strides = array<i32>} : memref<8x2x32xf32, #tpu.memory_space<vmem>>, vector<1x2x32xf32>,
    %121 = vector.broadcast %36 : vector<1x32xf32> to vector<2x32xf32>
    %122 = arith.mulf %117, %121 : vector<2x32xf32>
    %cst_40 = arith.constant dense<0.000000e+00> : vector<2xf32>
    %123 = vector.multi_reduction <add>, %122, %cst_40 [1] : vector<2x32xf32> to vector<2xf32>
    %124 = vector.shape_cast %123 : vector<2xf32> to vector<2x1xf32>
    %125 = vector.broadcast %37 : vector<1x1xf32> to vector<2x1xf32>
    %126 = arith.addf %124, %125 : vector<2x1xf32>
    %c3 = arith.constant 3 : index
    %c0_41 = arith.constant 0 : index
    %c0_42 = arith.constant 0 : index
    %127 = vector.load %arg10[%c3, %c0_41, %c0_42] : memref<8x2x128xf32, #tpu.memory_space<vmem>>, vector<1x2x128xf32>
    %128 = vector.shape_cast %127 : vector<1x2x128xf32> to vector<2x128xf32>
    %129 = arith.truncf %117 : vector<2x32xf32> to vector<2x32xbf16>
    %cst_43 = arith.constant dense<0.000000e+00> : vector<2x128xf32>
    %130 = tpu.matmul %129, %35, %cst_43 {dimension_numbers = #tpu.dot_dimension_numbers<[1], [0], [0], [1], [0, 0, 1, 1], [], []>} : vector<2x32xbf16>, vector<32x128xbf16>, vector<2x128xf32> -> vector<2x128xf32>
    %131 = arith.addf %128, %130 : vector<2x128xf32>
    %132 = arith.negf %131 : vector<2x128xf32>
    %133 = math.exp %132 : vector<2x128xf32>
    %cst_44 = arith.constant 1.000000e+00 : f32
    %134 = vector.broadcast %cst_44 : f32 to vector<2x128xf32>
    %135 = arith.addf %134, %133 : vector<2x128xf32>
    %136 = arith.divf %134, %135 : vector<2x128xf32>
    %137 = vector.extract_strided_slice %136 {offsets = [0, 0], sizes = [2, 32], strides = [1, 1]} : vector<2x128xf32> to vector<2x32xf32>
    %138 = vector.extract_strided_slice %136 {offsets = [0, 32], sizes = [2, 32], strides = [1, 1]} : vector<2x128xf32> to vector<2x32xf32>
    %139 = vector.extract_strided_slice %131 {offsets = [0, 64], sizes = [2, 32], strides = [1, 1]} : vector<2x128xf32> to vector<2x32xf32>
    %140 = math.tanh %139 : vector<2x32xf32>
    %141 = vector.extract_strided_slice %136 {offsets = [0, 96], sizes = [2, 32], strides = [1, 1]} : vector<2x128xf32> to vector<2x32xf32>
    %142 = arith.mulf %138, %115 : vector<2x32xf32>
    %143 = arith.mulf %137, %140 : vector<2x32xf32>
    %144 = arith.addf %142, %143 : vector<2x32xf32>
    %145 = math.tanh %144 : vector<2x32xf32>
    %146 = arith.mulf %141, %145 : vector<2x32xf32>
    %c3_45 = arith.constant 3 : index
    %c0_46 = arith.constant 0 : index
    %c0_47 = arith.constant 0 : index
    %147 = vector.load %arg11[%c3_45, %c0_46, %c0_47] : memref<8x2x32xf32, #tpu.memory_space<vmem>>, vector<1x2x32xf32>
    %148 = vector.shape_cast %147 : vector<1x2x32xf32> to vector<2x32xf32>
    %149 = vector.shape_cast %146 : vector<2x32xf32> to vector<1x2x32xf32>
    tpu.vector_store %arg11[%c3_45, %c0_46, %c0_47], %149 {strides = array<i32>} : memref<8x2x32xf32, #tpu.memory_space<vmem>>, vector<1x2x32xf32>,
    %150 = vector.broadcast %36 : vector<1x32xf32> to vector<2x32xf32>
    %151 = arith.mulf %146, %150 : vector<2x32xf32>
    %cst_48 = arith.constant dense<0.000000e+00> : vector<2xf32>
    %152 = vector.multi_reduction <add>, %151, %cst_48 [1] : vector<2x32xf32> to vector<2xf32>
    %153 = vector.shape_cast %152 : vector<2xf32> to vector<2x1xf32>
    %154 = vector.broadcast %37 : vector<1x1xf32> to vector<2x1xf32>
    %155 = arith.addf %153, %154 : vector<2x1xf32>
    %c4 = arith.constant 4 : index
    %c0_49 = arith.constant 0 : index
    %c0_50 = arith.constant 0 : index
    %156 = vector.load %arg10[%c4, %c0_49, %c0_50] : memref<8x2x128xf32, #tpu.memory_space<vmem>>, vector<1x2x128xf32>
    %157 = vector.shape_cast %156 : vector<1x2x128xf32> to vector<2x128xf32>
    %158 = arith.truncf %146 : vector<2x32xf32> to vector<2x32xbf16>
    %cst_51 = arith.constant dense<0.000000e+00> : vector<2x128xf32>
    %159 = tpu.matmul %158, %35, %cst_51 {dimension_numbers = #tpu.dot_dimension_numbers<[1], [0], [0], [1], [0, 0, 1, 1], [], []>} : vector<2x32xbf16>, vector<32x128xbf16>, vector<2x128xf32> -> vector<2x128xf32>
    %160 = arith.addf %157, %159 : vector<2x128xf32>
    %161 = arith.negf %160 : vector<2x128xf32>
    %162 = math.exp %161 : vector<2x128xf32>
    %cst_52 = arith.constant 1.000000e+00 : f32
    %163 = vector.broadcast %cst_52 : f32 to vector<2x128xf32>
    %164 = arith.addf %163, %162 : vector<2x128xf32>
    %165 = arith.divf %163, %164 : vector<2x128xf32>
    %166 = vector.extract_strided_slice %165 {offsets = [0, 0], sizes = [2, 32], strides = [1, 1]} : vector<2x128xf32> to vector<2x32xf32>
    %167 = vector.extract_strided_slice %165 {offsets = [0, 32], sizes = [2, 32], strides = [1, 1]} : vector<2x128xf32> to vector<2x32xf32>
    %168 = vector.extract_strided_slice %160 {offsets = [0, 64], sizes = [2, 32], strides = [1, 1]} : vector<2x128xf32> to vector<2x32xf32>
    %169 = math.tanh %168 : vector<2x32xf32>
    %170 = vector.extract_strided_slice %165 {offsets = [0, 96], sizes = [2, 32], strides = [1, 1]} : vector<2x128xf32> to vector<2x32xf32>
    %171 = arith.mulf %167, %144 : vector<2x32xf32>
    %172 = arith.mulf %166, %169 : vector<2x32xf32>
    %173 = arith.addf %171, %172 : vector<2x32xf32>
    %174 = math.tanh %173 : vector<2x32xf32>
    %175 = arith.mulf %170, %174 : vector<2x32xf32>
    %c4_53 = arith.constant 4 : index
    %c0_54 = arith.constant 0 : index
    %c0_55 = arith.constant 0 : index
    %176 = vector.load %arg11[%c4_53, %c0_54, %c0_55] : memref<8x2x32xf32, #tpu.memory_space<vmem>>, vector<1x2x32xf32>
    %177 = vector.shape_cast %176 : vector<1x2x32xf32> to vector<2x32xf32>
    %178 = vector.shape_cast %175 : vector<2x32xf32> to vector<1x2x32xf32>
    tpu.vector_store %arg11[%c4_53, %c0_54, %c0_55], %178 {strides = array<i32>} : memref<8x2x32xf32, #tpu.memory_space<vmem>>, vector<1x2x32xf32>,
    %179 = vector.broadcast %36 : vector<1x32xf32> to vector<2x32xf32>
    %180 = arith.mulf %175, %179 : vector<2x32xf32>
    %cst_56 = arith.constant dense<0.000000e+00> : vector<2xf32>
    %181 = vector.multi_reduction <add>, %180, %cst_56 [1] : vector<2x32xf32> to vector<2xf32>
    %182 = vector.shape_cast %181 : vector<2xf32> to vector<2x1xf32>
    %183 = vector.broadcast %37 : vector<1x1xf32> to vector<2x1xf32>
    %184 = arith.addf %182, %183 : vector<2x1xf32>
    %c5 = arith.constant 5 : index
    %c0_57 = arith.constant 0 : index
    %c0_58 = arith.constant 0 : index
    %185 = vector.load %arg10[%c5, %c0_57, %c0_58] : memref<8x2x128xf32, #tpu.memory_space<vmem>>, vector<1x2x128xf32>
    %186 = vector.shape_cast %185 : vector<1x2x128xf32> to vector<2x128xf32>
    %187 = arith.truncf %175 : vector<2x32xf32> to vector<2x32xbf16>
    %cst_59 = arith.constant dense<0.000000e+00> : vector<2x128xf32>
    %188 = tpu.matmul %187, %35, %cst_59 {dimension_numbers = #tpu.dot_dimension_numbers<[1], [0], [0], [1], [0, 0, 1, 1], [], []>} : vector<2x32xbf16>, vector<32x128xbf16>, vector<2x128xf32> -> vector<2x128xf32>
    %189 = arith.addf %186, %188 : vector<2x128xf32>
    %190 = arith.negf %189 : vector<2x128xf32>
    %191 = math.exp %190 : vector<2x128xf32>
    %cst_60 = arith.constant 1.000000e+00 : f32
    %192 = vector.broadcast %cst_60 : f32 to vector<2x128xf32>
    %193 = arith.addf %192, %191 : vector<2x128xf32>
    %194 = arith.divf %192, %193 : vector<2x128xf32>
    %195 = vector.extract_strided_slice %194 {offsets = [0, 0], sizes = [2, 32], strides = [1, 1]} : vector<2x128xf32> to vector<2x32xf32>
    %196 = vector.extract_strided_slice %194 {offsets = [0, 32], sizes = [2, 32], strides = [1, 1]} : vector<2x128xf32> to vector<2x32xf32>
    %197 = vector.extract_strided_slice %189 {offsets = [0, 64], sizes = [2, 32], strides = [1, 1]} : vector<2x128xf32> to vector<2x32xf32>
    %198 = math.tanh %197 : vector<2x32xf32>
    %199 = vector.extract_strided_slice %194 {offsets = [0, 96], sizes = [2, 32], strides = [1, 1]} : vector<2x128xf32> to vector<2x32xf32>
    %200 = arith.mulf %196, %173 : vector<2x32xf32>
    %201 = arith.mulf %195, %198 : vector<2x32xf32>
    %202 = arith.addf %200, %201 : vector<2x32xf32>
    %203 = math.tanh %202 : vector<2x32xf32>
    %204 = arith.mulf %199, %203 : vector<2x32xf32>
    %c5_61 = arith.constant 5 : index
    %c0_62 = arith.constant 0 : index
    %c0_63 = arith.constant 0 : index
    %205 = vector.load %arg11[%c5_61, %c0_62, %c0_63] : memref<8x2x32xf32, #tpu.memory_space<vmem>>, vector<1x2x32xf32>
    %206 = vector.shape_cast %205 : vector<1x2x32xf32> to vector<2x32xf32>
    %207 = vector.shape_cast %204 : vector<2x32xf32> to vector<1x2x32xf32>
    tpu.vector_store %arg11[%c5_61, %c0_62, %c0_63], %207 {strides = array<i32>} : memref<8x2x32xf32, #tpu.memory_space<vmem>>, vector<1x2x32xf32>,
    %208 = vector.broadcast %36 : vector<1x32xf32> to vector<2x32xf32>
    %209 = arith.mulf %204, %208 : vector<2x32xf32>
    %cst_64 = arith.constant dense<0.000000e+00> : vector<2xf32>
    %210 = vector.multi_reduction <add>, %209, %cst_64 [1] : vector<2x32xf32> to vector<2xf32>
    %211 = vector.shape_cast %210 : vector<2xf32> to vector<2x1xf32>
    %212 = vector.broadcast %37 : vector<1x1xf32> to vector<2x1xf32>
    %213 = arith.addf %211, %212 : vector<2x1xf32>
    %c6 = arith.constant 6 : index
    %c0_65 = arith.constant 0 : index
    %c0_66 = arith.constant 0 : index
    %214 = vector.load %arg10[%c6, %c0_65, %c0_66] : memref<8x2x128xf32, #tpu.memory_space<vmem>>, vector<1x2x128xf32>
    %215 = vector.shape_cast %214 : vector<1x2x128xf32> to vector<2x128xf32>
    %216 = arith.truncf %204 : vector<2x32xf32> to vector<2x32xbf16>
    %cst_67 = arith.constant dense<0.000000e+00> : vector<2x128xf32>
    %217 = tpu.matmul %216, %35, %cst_67 {dimension_numbers = #tpu.dot_dimension_numbers<[1], [0], [0], [1], [0, 0, 1, 1], [], []>} : vector<2x32xbf16>, vector<32x128xbf16>, vector<2x128xf32> -> vector<2x128xf32>
    %218 = arith.addf %215, %217 : vector<2x128xf32>
    %219 = arith.negf %218 : vector<2x128xf32>
    %220 = math.exp %219 : vector<2x128xf32>
    %cst_68 = arith.constant 1.000000e+00 : f32
    %221 = vector.broadcast %cst_68 : f32 to vector<2x128xf32>
    %222 = arith.addf %221, %220 : vector<2x128xf32>
    %223 = arith.divf %221, %222 : vector<2x128xf32>
    %224 = vector.extract_strided_slice %223 {offsets = [0, 0], sizes = [2, 32], strides = [1, 1]} : vector<2x128xf32> to vector<2x32xf32>
    %225 = vector.extract_strided_slice %223 {offsets = [0, 32], sizes = [2, 32], strides = [1, 1]} : vector<2x128xf32> to vector<2x32xf32>
    %226 = vector.extract_strided_slice %218 {offsets = [0, 64], sizes = [2, 32], strides = [1, 1]} : vector<2x128xf32> to vector<2x32xf32>
    %227 = math.tanh %226 : vector<2x32xf32>
    %228 = vector.extract_strided_slice %223 {offsets = [0, 96], sizes = [2, 32], strides = [1, 1]} : vector<2x128xf32> to vector<2x32xf32>
    %229 = arith.mulf %225, %202 : vector<2x32xf32>
    %230 = arith.mulf %224, %227 : vector<2x32xf32>
    %231 = arith.addf %229, %230 : vector<2x32xf32>
    %232 = math.tanh %231 : vector<2x32xf32>
    %233 = arith.mulf %228, %232 : vector<2x32xf32>
    %c6_69 = arith.constant 6 : index
    %c0_70 = arith.constant 0 : index
    %c0_71 = arith.constant 0 : index
    %234 = vector.load %arg11[%c6_69, %c0_70, %c0_71] : memref<8x2x32xf32, #tpu.memory_space<vmem>>, vector<1x2x32xf32>
    %235 = vector.shape_cast %234 : vector<1x2x32xf32> to vector<2x32xf32>
    %236 = vector.shape_cast %233 : vector<2x32xf32> to vector<1x2x32xf32>
    tpu.vector_store %arg11[%c6_69, %c0_70, %c0_71], %236 {strides = array<i32>} : memref<8x2x32xf32, #tpu.memory_space<vmem>>, vector<1x2x32xf32>,
    %237 = vector.broadcast %36 : vector<1x32xf32> to vector<2x32xf32>
    %238 = arith.mulf %233, %237 : vector<2x32xf32>
    %cst_72 = arith.constant dense<0.000000e+00> : vector<2xf32>
    %239 = vector.multi_reduction <add>, %238, %cst_72 [1] : vector<2x32xf32> to vector<2xf32>
    %240 = vector.shape_cast %239 : vector<2xf32> to vector<2x1xf32>
    %241 = vector.broadcast %37 : vector<1x1xf32> to vector<2x1xf32>
    %242 = arith.addf %240, %241 : vector<2x1xf32>
    %c7 = arith.constant 7 : index
    %c0_73 = arith.constant 0 : index
    %c0_74 = arith.constant 0 : index
    %243 = vector.load %arg10[%c7, %c0_73, %c0_74] : memref<8x2x128xf32, #tpu.memory_space<vmem>>, vector<1x2x128xf32>
    %244 = vector.shape_cast %243 : vector<1x2x128xf32> to vector<2x128xf32>
    %245 = arith.truncf %233 : vector<2x32xf32> to vector<2x32xbf16>
    %cst_75 = arith.constant dense<0.000000e+00> : vector<2x128xf32>
    %246 = tpu.matmul %245, %35, %cst_75 {dimension_numbers = #tpu.dot_dimension_numbers<[1], [0], [0], [1], [0, 0, 1, 1], [], []>} : vector<2x32xbf16>, vector<32x128xbf16>, vector<2x128xf32> -> vector<2x128xf32>
    %247 = arith.addf %244, %246 : vector<2x128xf32>
    %248 = arith.negf %247 : vector<2x128xf32>
    %249 = math.exp %248 : vector<2x128xf32>
    %cst_76 = arith.constant 1.000000e+00 : f32
    %250 = vector.broadcast %cst_76 : f32 to vector<2x128xf32>
    %251 = arith.addf %250, %249 : vector<2x128xf32>
    %252 = arith.divf %250, %251 : vector<2x128xf32>
    %253 = vector.extract_strided_slice %252 {offsets = [0, 0], sizes = [2, 32], strides = [1, 1]} : vector<2x128xf32> to vector<2x32xf32>
    %254 = vector.extract_strided_slice %252 {offsets = [0, 32], sizes = [2, 32], strides = [1, 1]} : vector<2x128xf32> to vector<2x32xf32>
    %255 = vector.extract_strided_slice %247 {offsets = [0, 64], sizes = [2, 32], strides = [1, 1]} : vector<2x128xf32> to vector<2x32xf32>
    %256 = math.tanh %255 : vector<2x32xf32>
    %257 = vector.extract_strided_slice %252 {offsets = [0, 96], sizes = [2, 32], strides = [1, 1]} : vector<2x128xf32> to vector<2x32xf32>
    %258 = arith.mulf %254, %231 : vector<2x32xf32>
    %259 = arith.mulf %253, %256 : vector<2x32xf32>
    %260 = arith.addf %258, %259 : vector<2x32xf32>
    %261 = math.tanh %260 : vector<2x32xf32>
    %262 = arith.mulf %257, %261 : vector<2x32xf32>
    %c7_77 = arith.constant 7 : index
    %c0_78 = arith.constant 0 : index
    %c0_79 = arith.constant 0 : index
    %263 = vector.load %arg11[%c7_77, %c0_78, %c0_79] : memref<8x2x32xf32, #tpu.memory_space<vmem>>, vector<1x2x32xf32>
    %264 = vector.shape_cast %263 : vector<1x2x32xf32> to vector<2x32xf32>
    %265 = vector.shape_cast %262 : vector<2x32xf32> to vector<1x2x32xf32>
    tpu.vector_store %arg11[%c7_77, %c0_78, %c0_79], %265 {strides = array<i32>} : memref<8x2x32xf32, #tpu.memory_space<vmem>>, vector<1x2x32xf32>,
    %266 = vector.broadcast %36 : vector<1x32xf32> to vector<2x32xf32>
    %267 = arith.mulf %262, %266 : vector<2x32xf32>
    %cst_80 = arith.constant dense<0.000000e+00> : vector<2xf32>
    %268 = vector.multi_reduction <add>, %267, %cst_80 [1] : vector<2x32xf32> to vector<2xf32>
    %269 = vector.shape_cast %268 : vector<2xf32> to vector<2x1xf32>
    %270 = vector.broadcast %37 : vector<1x1xf32> to vector<2x1xf32>
    %271 = arith.addf %269, %270 : vector<2x1xf32>
    %272 = tpu.concatenate %68, %97, %126, %155, %184, %213, %242, %271 in 1 : vector<2x1xf32>, vector<2x1xf32>, vector<2x1xf32>, vector<2x1xf32>, vector<2x1xf32>, vector<2x1xf32>, vector<2x1xf32>, vector<2x1xf32> -> vector<2x8xf32>
    %cst_81 = arith.constant dense<0xFF800000> : vector<2xf32>
    %273 = vector.multi_reduction <maximumf>, %272, %cst_81 [1] : vector<2x8xf32> to vector<2xf32>
    %274 = vector.shape_cast %273 : vector<2xf32> to vector<2x1xf32>
    %275 = vector.broadcast %274 : vector<2x1xf32> to vector<2x8xf32>
    %276 = arith.subf %272, %275 : vector<2x8xf32>
    %277 = math.exp %276 : vector<2x8xf32>
    %cst_82 = arith.constant dense<0.000000e+00> : vector<2xf32>
    %278 = vector.multi_reduction <add>, %277, %cst_82 [1] : vector<2x8xf32> to vector<2xf32>
    %279 = vector.shape_cast %278 : vector<2xf32> to vector<2x1xf32>
    %280 = vector.broadcast %279 : vector<2x1xf32> to vector<2x8xf32>
    %281 = arith.divf %277, %280 : vector<2x8xf32>
    %282 = vector.extract_strided_slice %281 {offsets = [0, 0], sizes = [2, 1], strides = [1, 1]} : vector<2x8xf32> to vector<2x1xf32>
    %c0_83 = arith.constant 0 : index
    %c0_84 = arith.constant 0 : index
    %c0_85 = arith.constant 0 : index
    %283 = vector.load %arg11[%c0_83, %c0_84, %c0_85] : memref<8x2x32xf32, #tpu.memory_space<vmem>>, vector<1x2x32xf32>
    %284 = vector.shape_cast %283 : vector<1x2x32xf32> to vector<2x32xf32>
    %285 = vector.broadcast %282 : vector<2x1xf32> to vector<2x32xf32>
    %286 = arith.mulf %285, %284 : vector<2x32xf32>
    %287 = vector.extract_strided_slice %281 {offsets = [0, 1], sizes = [2, 1], strides = [1, 1]} : vector<2x8xf32> to vector<2x1xf32>
    %c1_86 = arith.constant 1 : index
    %c0_87 = arith.constant 0 : index
    %c0_88 = arith.constant 0 : index
    %288 = vector.load %arg11[%c1_86, %c0_87, %c0_88] : memref<8x2x32xf32, #tpu.memory_space<vmem>>, vector<1x2x32xf32>
    %289 = vector.shape_cast %288 : vector<1x2x32xf32> to vector<2x32xf32>
    %290 = vector.broadcast %287 : vector<2x1xf32> to vector<2x32xf32>
    %291 = arith.mulf %290, %289 : vector<2x32xf32>
    %292 = arith.addf %286, %291 : vector<2x32xf32>
    %293 = vector.extract_strided_slice %281 {offsets = [0, 2], sizes = [2, 1], strides = [1, 1]} : vector<2x8xf32> to vector<2x1xf32>
    %c2_89 = arith.constant 2 : index
    %c0_90 = arith.constant 0 : index
    %c0_91 = arith.constant 0 : index
    %294 = vector.load %arg11[%c2_89, %c0_90, %c0_91] : memref<8x2x32xf32, #tpu.memory_space<vmem>>, vector<1x2x32xf32>
    %295 = vector.shape_cast %294 : vector<1x2x32xf32> to vector<2x32xf32>
    %296 = vector.broadcast %293 : vector<2x1xf32> to vector<2x32xf32>
    %297 = arith.mulf %296, %295 : vector<2x32xf32>
    %298 = arith.addf %292, %297 : vector<2x32xf32>
    %299 = vector.extract_strided_slice %281 {offsets = [0, 3], sizes = [2, 1], strides = [1, 1]} : vector<2x8xf32> to vector<2x1xf32>
    %c3_92 = arith.constant 3 : index
    %c0_93 = arith.constant 0 : index
    %c0_94 = arith.constant 0 : index
    %300 = vector.load %arg11[%c3_92, %c0_93, %c0_94] : memref<8x2x32xf32, #tpu.memory_space<vmem>>, vector<1x2x32xf32>
    %301 = vector.shape_cast %300 : vector<1x2x32xf32> to vector<2x32xf32>
    %302 = vector.broadcast %299 : vector<2x1xf32> to vector<2x32xf32>
    %303 = arith.mulf %302, %301 : vector<2x32xf32>
    %304 = arith.addf %298, %303 : vector<2x32xf32>
    %305 = vector.extract_strided_slice %281 {offsets = [0, 4], sizes = [2, 1], strides = [1, 1]} : vector<2x8xf32> to vector<2x1xf32>
    %c4_95 = arith.constant 4 : index
    %c0_96 = arith.constant 0 : index
    %c0_97 = arith.constant 0 : index
    %306 = vector.load %arg11[%c4_95, %c0_96, %c0_97] : memref<8x2x32xf32, #tpu.memory_space<vmem>>, vector<1x2x32xf32>
    %307 = vector.shape_cast %306 : vector<1x2x32xf32> to vector<2x32xf32>
    %308 = vector.broadcast %305 : vector<2x1xf32> to vector<2x32xf32>
    %309 = arith.mulf %308, %307 : vector<2x32xf32>
    %310 = arith.addf %304, %309 : vector<2x32xf32>
    %311 = vector.extract_strided_slice %281 {offsets = [0, 5], sizes = [2, 1], strides = [1, 1]} : vector<2x8xf32> to vector<2x1xf32>
    %c5_98 = arith.constant 5 : index
    %c0_99 = arith.constant 0 : index
    %c0_100 = arith.constant 0 : index
    %312 = vector.load %arg11[%c5_98, %c0_99, %c0_100] : memref<8x2x32xf32, #tpu.memory_space<vmem>>, vector<1x2x32xf32>
    %313 = vector.shape_cast %312 : vector<1x2x32xf32> to vector<2x32xf32>
    %314 = vector.broadcast %311 : vector<2x1xf32> to vector<2x32xf32>
    %315 = arith.mulf %314, %313 : vector<2x32xf32>
    %316 = arith.addf %310, %315 : vector<2x32xf32>
    %317 = vector.extract_strided_slice %281 {offsets = [0, 6], sizes = [2, 1], strides = [1, 1]} : vector<2x8xf32> to vector<2x1xf32>
    %c6_101 = arith.constant 6 : index
    %c0_102 = arith.constant 0 : index
    %c0_103 = arith.constant 0 : index
    %318 = vector.load %arg11[%c6_101, %c0_102, %c0_103] : memref<8x2x32xf32, #tpu.memory_space<vmem>>, vector<1x2x32xf32>
    %319 = vector.shape_cast %318 : vector<1x2x32xf32> to vector<2x32xf32>
    %320 = vector.broadcast %317 : vector<2x1xf32> to vector<2x32xf32>
    %321 = arith.mulf %320, %319 : vector<2x32xf32>
    %322 = arith.addf %316, %321 : vector<2x32xf32>
    %323 = vector.extract_strided_slice %281 {offsets = [0, 7], sizes = [2, 1], strides = [1, 1]} : vector<2x8xf32> to vector<2x1xf32>
    %c7_104 = arith.constant 7 : index
    %c0_105 = arith.constant 0 : index
    %c0_106 = arith.constant 0 : index
    %324 = vector.load %arg11[%c7_104, %c0_105, %c0_106] : memref<8x2x32xf32, #tpu.memory_space<vmem>>, vector<1x2x32xf32>
    %325 = vector.shape_cast %324 : vector<1x2x32xf32> to vector<2x32xf32>
    %326 = vector.broadcast %323 : vector<2x1xf32> to vector<2x32xf32>
    %327 = arith.mulf %326, %325 : vector<2x32xf32>
    %328 = arith.addf %322, %327 : vector<2x32xf32>
    %c0_107 = arith.constant 0 : index
    %c0_108 = arith.constant 0 : index
    %329 = vector.load %arg7[%c0_107, %c0_108] : memref<32x1xf32, #tpu.memory_space<vmem>>, vector<32x1xf32>
    %cst_109 = arith.constant dense<0.000000e+00> : vector<2x1xf32>
    %330 = tpu.matmul %328, %329, %cst_109 {dimension_numbers = #tpu.dot_dimension_numbers<[1], [0], [0], [1], [0, 0, 1, 1], [], []>} : vector<2x32xf32>, vector<32x1xf32>, vector<2x1xf32> -> vector<2x1xf32>
    %c0_110 = arith.constant 0 : index
    %c0_111 = arith.constant 0 : index
    %331 = vector.load %arg8[%c0_110, %c0_111] : memref<1x1xf32, #tpu.memory_space<vmem>>, vector<1x1xf32>
    %332 = vector.broadcast %331 : vector<1x1xf32> to vector<2x1xf32>
    %333 = arith.addf %330, %332 : vector<2x1xf32>
    %cst_112 = arith.constant 0.000000e+00 : f32
    %334 = vector.broadcast %cst_112 : f32 to vector<2x119xf32>
    %335 = tpu.concatenate %333, %281, %334 in 1 : vector<2x1xf32>, vector<2x8xf32>, vector<2x119xf32> -> vector<2x128xf32>
    %c0_113 = arith.constant 0 : index
    %c0_114 = arith.constant 0 : index
    %336 = vector.load %arg9[%c0_113, %c0_114] : memref<2x128xf32, #tpu.memory_space<vmem>>, vector<2x128xf32>
    tpu.vector_store %arg9[%c0_113, %c0_114], %335 {strides = array<i32>} : memref<2x128xf32, #tpu.memory_space<vmem>>, vector<2x128xf32>,
    return
  }
  func.func @transform_0(%arg0: i32) -> (i32, i32, i32) {
    %c0_i32 = arith.constant 0 : i32
    %c0_i32_0 = arith.constant 0 : i32
    %c0_i32_1 = arith.constant 0 : i32
    return %c0_i32, %arg0, %c0_i32_0 : i32, i32, i32
  }
  func.func @transform_1(%arg0: i32) -> (i32, i32) {
    %c0_i32 = arith.constant 0 : i32
    %c0_i32_0 = arith.constant 0 : i32
    %c0_i32_1 = arith.constant 0 : i32
    return %c0_i32, %c0_i32_0 : i32, i32
  }
  func.func @transform_2(%arg0: i32) -> (i32, i32) {
    %c0_i32 = arith.constant 0 : i32
    %c0_i32_0 = arith.constant 0 : i32
    %c0_i32_1 = arith.constant 0 : i32
    return %c0_i32, %c0_i32_0 : i32, i32
  }
  func.func @transform_3(%arg0: i32) -> (i32, i32) {
    %c0_i32 = arith.constant 0 : i32
    %c0_i32_0 = arith.constant 0 : i32
    %c0_i32_1 = arith.constant 0 : i32
    return %c0_i32, %c0_i32_0 : i32, i32
  }
  func.func @transform_4(%arg0: i32) -> (i32, i32) {
    %c0_i32 = arith.constant 0 : i32
    %c0_i32_0 = arith.constant 0 : i32
    %c0_i32_1 = arith.constant 0 : i32
    return %c0_i32, %c0_i32_0 : i32, i32
  }
  func.func @transform_5(%arg0: i32) -> (i32, i32) {
    %c0_i32 = arith.constant 0 : i32
    %c0_i32_0 = arith.constant 0 : i32
    %c0_i32_1 = arith.constant 0 : i32
    return %c0_i32, %c0_i32_0 : i32, i32
  }
  func.func @transform_6(%arg0: i32) -> (i32, i32) {
    %c0_i32 = arith.constant 0 : i32
    %c0_i32_0 = arith.constant 0 : i32
    %c0_i32_1 = arith.constant 0 : i32
    return %c0_i32, %c0_i32_0 : i32, i32
  }
  func.func @transform_7(%arg0: i32) -> (i32, i32) {
    %c0_i32 = arith.constant 0 : i32
    %c0_i32_0 = arith.constant 0 : i32
    %c0_i32_1 = arith.constant 0 : i32
    return %c0_i32, %c0_i32_0 : i32, i32
  }
  func.func @transform_8(%arg0: i32) -> (i32, i32) {
    %c0_i32 = arith.constant 0 : i32
    %c0_i32_0 = arith.constant 0 : i32
    return %arg0, %c0_i32 : i32, i32
  }
}

</mosaic_0001>

<llo_original>
// kernel: lstm_with_attention.1
$region0: #{lstm_with_attention.1}
  #allocation0 [shape = 'u32[]', space=smem, size = 0x4, offset = 0x4, fixed_abs, tag = 'smem constant byte address 0x4 - core index']
  #allocation1 [shape = 'u32[144,128]{1,0:T(1,128)}', space=vmem, size = 0x12000, scoped, tag = 'internal scratch']
  #allocation2 [shape = 'f32[8,2,128]{2,1,0:T(2,128)}', space=vmem, size = 0x2000, scoped, tag = 'scratch operand']
  #allocation3 [shape = 'f32[8,2,32]{2,1,0:T(2,128)}', space=vmem, size = 0x2000, scoped, tag = 'scratch operand']
  #allocation4 [shape = 'f32[1,1]{1,0:T(1,128)S(1)}', space=vmem, size = 0x200, scoped, tag = 'scoped memory for lstm_with_attention.1']
  #allocation5 [shape = 'f32[1,1]{1,0:T(1,128)S(1)}', space=vmem, size = 0x200, scoped, tag = 'scoped memory for lstm_with_attention.1']
  %s0 = inlined_call_operand.vmem [shape: f32[8,2,4], index: 0, kind: input, shape index: {}]
  %s1 = inlined_call_operand.vmem [shape: f32[4,128], index: 1, kind: input, shape index: {}]
  %s2 = inlined_call_operand.vmem [shape: f32[32,128], index: 2, kind: input, shape index: {}]
  %s3 = inlined_call_operand.vmem [shape: f32[1,128], index: 3, kind: input, shape index: {}]
  %s4 = inlined_call_operand.vmem [shape: f32[1,32], index: 4, kind: input, shape index: {}]
  %s5 = inlined_call_operand.<no memory space> [shape: f32[1,1], index: 5, kind: input, shape index: {}]
  %s6 = inlined_call_operand.vmem [shape: f32[32,1], index: 6, kind: input, shape index: {}]
  %s7 = inlined_call_operand.<no memory space> [shape: f32[1,1], index: 7, kind: input, shape index: {}]
  %s8 = inlined_call_operand.vmem [shape: f32[2,128], index: 8, kind: output, shape index: {}]
  %s9 = sld [smem:[#allocation0]]
  $region42: #{lstm_with_attention.1} parent=0
    _
  %s11 = ssub.s32 1, %s9
  %s12 = scalar_select 0, %s11, %s9
  %v13 = vstv %s5
  %14 = vst [vmem:[#allocation4] sm:$0x1] %v13
  %v15 = vstv %s7
  %16 = vst [vmem:[#allocation5] sm:$0x1] %v15
  // Predicated region
  $region2: #{lstm_with_attention.1} parent=0 // pred_check
    _
  $region3: #{lstm_with_attention.1} parent=0 // pred_check_branch
    %18 = sbr.rel (0) target = $region5
  $region4: #{lstm_with_attention.1} parent=0 // pred_region
    _
  $region5: #{lstm_with_attention.1} parent=0 // pred_fallthru
    _
  // Predicated region
  $region6: #{lstm_with_attention.1} parent=0 // pred_check
    _
  $region7: #{lstm_with_attention.1} parent=0 // pred_check_branch
    %20 = sbr.rel (0) target = $region9
  $region8: #{lstm_with_attention.1} parent=0 // pred_region
    _
  $region9: #{lstm_with_attention.1} parent=0 // pred_fallthru
    _
  // Predicated region
  $region10: #{lstm_with_attention.1} parent=0 // pred_check
    _
  $region11: #{lstm_with_attention.1} parent=0 // pred_check_branch
    %22 = sbr.rel (0) target = $region13
  $region12: #{lstm_with_attention.1} parent=0 // pred_region
    _
  $region13: #{lstm_with_attention.1} parent=0 // pred_fallthru
    _
  // Predicated region
  $region14: #{lstm_with_attention.1} parent=0 // pred_check
    _
  $region15: #{lstm_with_attention.1} parent=0 // pred_check_branch
    %24 = sbr.rel (0) target = $region17
  $region16: #{lstm_with_attention.1} parent=0 // pred_region
    _
  $region17: #{lstm_with_attention.1} parent=0 // pred_fallthru
    _
  // Predicated region
  $region18: #{lstm_with_attention.1} parent=0 // pred_check
    _
  $region19: #{lstm_with_attention.1} parent=0 // pred_check_branch
    %26 = sbr.rel (0) target = $region21
  $region20: #{lstm_with_attention.1} parent=0 // pred_region
    _
  $region21: #{lstm_with_attention.1} parent=0 // pred_fallthru
    _
  // Predicated region
  $region22: #{lstm_with_attention.1} parent=0 // pred_check
    _
  $region23: #{lstm_with_attention.1} parent=0 // pred_check_branch
    %28 = sbr.rel (0) target = $region25
  $region24: #{lstm_with_attention.1} parent=0 // pred_region
    _
  $region25: #{lstm_with_attention.1} parent=0 // pred_fallthru
    _
  // Predicated region
  $region26: #{lstm_with_attention.1} parent=0 // pred_check
    _
  $region27: #{lstm_with_attention.1} parent=0 // pred_check_branch
    %30 = sbr.rel (0) target = $region29
  $region28: #{lstm_with_attention.1} parent=0 // pred_region
    _
  $region29: #{lstm_with_attention.1} parent=0 // pred_fallthru
    _
  // Predicated region
  $region30: #{lstm_with_attention.1} parent=0 // pred_check
    _
  $region31: #{lstm_with_attention.1} parent=0 // pred_check_branch
    %32 = sbr.rel (0) target = $region33
  $region32: #{lstm_with_attention.1} parent=0 // pred_region
    _
  $region33: #{lstm_with_attention.1} parent=0 // pred_fallthru
    _
  %v34 = vld [vmem:[%s0] sm:$0x3]
  %v35 = vld [vmem:[%s0 + $0x2] sm:$0x3]
  %v36 = vld [vmem:[%s0 + $0x4] sm:$0x3]
  %v37 = vld [vmem:[%s0 + $0x6] sm:$0x3]
  %v38 = vld [vmem:[%s0 + $0x8] sm:$0x3]
  %v39 = vld [vmem:[%s0 + $0xa] sm:$0x3]
  %v40 = vld [vmem:[%s0 + $0xc] sm:$0x3]
  %v41 = vld [vmem:[%s0 + $0xe] sm:$0x3]
  %v42 = vld [vmem:[%s1] sm:$0xf]
  %44 = vset.pattern.permute.xlu0 0
  %45 = vperm.xlu0 %44, %v34
  %v46 = vpop.permute.xlu0 %45
  %49 = vset.pattern.permute.xlu0 0
  %50 = vperm.xlu0 %49, %v35
  %v51 = vpop.permute.xlu0 %50
  %54 = vset.pattern.permute.xlu0 0
  %55 = vperm.xlu0 %54, %v36
  %v56 = vpop.permute.xlu0 %55
  %59 = vset.pattern.permute.xlu0 0
  %60 = vperm.xlu0 %59, %v37
  %v61 = vpop.permute.xlu0 %60
  %64 = vset.pattern.permute.xlu0 0
  %65 = vperm.xlu0 %64, %v38
  %v66 = vpop.permute.xlu0 %65
  %69 = vset.pattern.permute.xlu0 0
  %70 = vperm.xlu0 %69, %v39
  %v71 = vpop.permute.xlu0 %70
  %74 = vset.pattern.permute.xlu0 0
  %75 = vperm.xlu0 %74, %v40
  %v76 = vpop.permute.xlu0 %75
  %79 = vset.pattern.permute.xlu0 0
  %80 = vperm.xlu0 %79, %v41
  %v81 = vpop.permute.xlu0 %80
  %v83 = vlaneseq
  %v84 = vshrl.u32 %v83, 7
  %v85 = vsub.s32 0, %v84
  %v86 = vrot.slane %v42, %v85
  %v87 = vmul.f32 %v46, %v86
  %v88 = vmul.f32 %v51, %v86
  %v89 = vmul.f32 %v56, %v86
  %v90 = vmul.f32 %v61, %v86
  %v91 = vmul.f32 %v66, %v86
  %v92 = vmul.f32 %v71, %v86
  %v93 = vmul.f32 %v76, %v86
  %v94 = vmul.f32 %v81, %v86
  %v95 = vld [vmem:[%s3] sm:$0x1]
  %v97 = vlaneseq
  %v98 = vshrl.u32 %v97, 7
  %v99 = vsub.s32 0, %v98
  %v100 = vrot.slane %v95, %v99
  %v102 = vadd.f32 %v87, %v100
  %v103 = vadd.f32 %v88, %v100
  %v104 = vadd.f32 %v89, %v100
  %v105 = vadd.f32 %v90, %v100
  %v106 = vadd.f32 %v91, %v100
  %v107 = vadd.f32 %v92, %v100
  %v108 = vadd.f32 %v93, %v100
  %v109 = vadd.f32 %v94, %v100
  %110 = vset.pattern.permute.xlu0 1
  %111 = vperm.xlu0 %110, %v34
  %v112 = vpop.permute.xlu0 %111
  %114 = vset.pattern.permute.xlu0 1
  %115 = vperm.xlu0 %114, %v35
  %v116 = vpop.permute.xlu0 %115
  %118 = vset.pattern.permute.xlu0 1
  %119 = vperm.xlu0 %118, %v36
  %v120 = vpop.permute.xlu0 %119
  %122 = vset.pattern.permute.xlu0 1
  %123 = vperm.xlu0 %122, %v37
  %v124 = vpop.permute.xlu0 %123
  %126 = vset.pattern.permute.xlu0 1
  %127 = vperm.xlu0 %126, %v38
  %v128 = vpop.permute.xlu0 %127
  %130 = vset.pattern.permute.xlu0 1
  %131 = vperm.xlu0 %130, %v39
  %v132 = vpop.permute.xlu0 %131
  %134 = vset.pattern.permute.xlu0 1
  %135 = vperm.xlu0 %134, %v40
  %v136 = vpop.permute.xlu0 %135
  %138 = vset.pattern.permute.xlu0 1
  %139 = vperm.xlu0 %138, %v41
  %v140 = vpop.permute.xlu0 %139
  %v142 = vlaneseq
  %v143 = vshrl.u32 %v142, 7
  %v144 = vsub.s32 1, %v143
  %v145 = vrot.slane %v42, %v144
  %v146 = vmul.f32 %v112, %v145
  %v147 = vmul.f32 %v116, %v145
  %v148 = vmul.f32 %v120, %v145
  %v149 = vmul.f32 %v124, %v145
  %v150 = vmul.f32 %v128, %v145
  %v151 = vmul.f32 %v132, %v145
  %v152 = vmul.f32 %v136, %v145
  %v153 = vmul.f32 %v140, %v145
  %v154 = vadd.f32 %v102, %v146
  %v155 = vadd.f32 %v103, %v147
  %v156 = vadd.f32 %v104, %v148
  %v157 = vadd.f32 %v105, %v149
  %v158 = vadd.f32 %v106, %v150
  %v159 = vadd.f32 %v107, %v151
  %v160 = vadd.f32 %v108, %v152
  %v161 = vadd.f32 %v109, %v153
  %162 = vset.pattern.permute.xlu0 2
  %163 = vperm.xlu0 %162, %v34
  %v164 = vpop.permute.xlu0 %163
  %166 = vset.pattern.permute.xlu0 2
  %167 = vperm.xlu0 %166, %v35
  %v168 = vpop.permute.xlu0 %167
  %170 = vset.pattern.permute.xlu0 2
  %171 = vperm.xlu0 %170, %v36
  %v172 = vpop.permute.xlu0 %171
  %174 = vset.pattern.permute.xlu0 2
  %175 = vperm.xlu0 %174, %v37
  %v176 = vpop.permute.xlu0 %175
  %178 = vset.pattern.permute.xlu0 2
  %179 = vperm.xlu0 %178, %v38
  %v180 = vpop.permute.xlu0 %179
  %182 = vset.pattern.permute.xlu0 2
  %183 = vperm.xlu0 %182, %v39
  %v184 = vpop.permute.xlu0 %183
  %186 = vset.pattern.permute.xlu0 2
  %187 = vperm.xlu0 %186, %v40
  %v188 = vpop.permute.xlu0 %187
  %190 = vset.pattern.permute.xlu0 2
  %191 = vperm.xlu0 %190, %v41
  %v192 = vpop.permute.xlu0 %191
  %v194 = vlaneseq
  %v195 = vshrl.u32 %v194, 7
  %v196 = vsub.s32 2, %v195
  %v197 = vrot.slane %v42, %v196
  %v198 = vmul.f32 %v164, %v197
  %v199 = vmul.f32 %v168, %v197
  %v200 = vmul.f32 %v172, %v197
  %v201 = vmul.f32 %v176, %v197
  %v202 = vmul.f32 %v180, %v197
  %v203 = vmul.f32 %v184, %v197
  %v204 = vmul.f32 %v188, %v197
  %v205 = vmul.f32 %v192, %v197
  %v206 = vadd.f32 %v154, %v198
  %v207 = vadd.f32 %v155, %v199
  %v208 = vadd.f32 %v156, %v200
  %v209 = vadd.f32 %v157, %v201
  %v210 = vadd.f32 %v158, %v202
  %v211 = vadd.f32 %v159, %v203
  %v212 = vadd.f32 %v160, %v204
  %v213 = vadd.f32 %v161, %v205
  %214 = vset.pattern.permute.xlu0 3
  %215 = vperm.xlu0 %214, %v34
  %v216 = vpop.permute.xlu0 %215
  %218 = vset.pattern.permute.xlu0 3
  %219 = vperm.xlu0 %218, %v35
  %v220 = vpop.permute.xlu0 %219
  %222 = vset.pattern.permute.xlu0 3
  %223 = vperm.xlu0 %222, %v36
  %v224 = vpop.permute.xlu0 %223
  %226 = vset.pattern.permute.xlu0 3
  %227 = vperm.xlu0 %226, %v37
  %v228 = vpop.permute.xlu0 %227
  %230 = vset.pattern.permute.xlu0 3
  %231 = vperm.xlu0 %230, %v38
  %v232 = vpop.permute.xlu0 %231
  %234 = vset.pattern.permute.xlu0 3
  %235 = vperm.xlu0 %234, %v39
  %v236 = vpop.permute.xlu0 %235
  %238 = vset.pattern.permute.xlu0 3
  %239 = vperm.xlu0 %238, %v40
  %v240 = vpop.permute.xlu0 %239
  %242 = vset.pattern.permute.xlu0 3
  %243 = vperm.xlu0 %242, %v41
  %v244 = vpop.permute.xlu0 %243
  %v246 = vlaneseq
  %v247 = vshrl.u32 %v246, 7
  %v248 = vsub.s32 3, %v247
  %v249 = vrot.slane %v42, %v248
  %v250 = vmul.f32 %v216, %v249
  %v251 = vmul.f32 %v220, %v249
  %v252 = vmul.f32 %v224, %v249
  %v253 = vmul.f32 %v228, %v249
  %v254 = vmul.f32 %v232, %v249
  %v255 = vmul.f32 %v236, %v249
  %v256 = vmul.f32 %v240, %v249
  %v257 = vmul.f32 %v244, %v249
  %v258 = vadd.f32 %v206, %v250
  %v259 = vadd.f32 %v207, %v251
  %v260 = vadd.f32 %v208, %v252
  %v261 = vadd.f32 %v209, %v253
  %v262 = vadd.f32 %v210, %v254
  %v263 = vadd.f32 %v211, %v255
  %v264 = vadd.f32 %v212, %v256
  %v265 = vadd.f32 %v213, %v257
  %266 = vst [vmem:[#allocation2] sm:$0x3] %v258
  %267 = vst [vmem:[#allocation2 + $0x2] sm:$0x3] %v259
  %268 = vst [vmem:[#allocation2 + $0x4] sm:$0x3] %v260
  %269 = vst [vmem:[#allocation2 + $0x6] sm:$0x3] %v261
  %270 = vst [vmem:[#allocation2 + $0x8] sm:$0x3] %v262
  %271 = vst [vmem:[#allocation2 + $0xa] sm:$0x3] %v263
  %272 = vst [vmem:[#allocation2 + $0xc] sm:$0x3] %v264
  %273 = vst [vmem:[#allocation2 + $0xe] sm:$0x3] %v265
  %v274 = vld [vmem:[%s2] sm:$0xff]
  %v275 = vld [vmem:[%s2 + $0x8] sm:$0xff]
  %v276 = vld [vmem:[%s2 + $0x10] sm:$0xff]
  %v277 = vld [vmem:[%s2 + $0x18] sm:$0xff]
  %v278 = vpack.c.bf16 %v275, %v274
  %v279 = vpack.c.bf16 %v277, %v276
  %v280 = vld [vmem:[%s4] sm:$0x1]
  %v281 = vld [vmem:[#allocation4] sm:$0x1]
  %v282 = vld [vmem:[#allocation2] sm:$0x3]
  %vm283 = vcmask 261120
  %v285 = vsel %vm283, 0, 0
  %287 = vmatprep.subr.bf16.mxu0 0
  %288 = vmatpush1.bf16.msra.mxu0 %v278
  %289 = vmatprep.subr.bf16.mxu0 0
  %290 = vmatpush1.bf16.msra.mxu0 %v279
  %291 = vmatprep.subr.bf16.mxu0 0
  %292 = vmatpush1.bf16.msra.mxu0 0
  %293 = vmatprep.subr.bf16.mxu0 0
  %294 = vmatpush1.bf16.msra.mxu0 0
  %295 = vmatprep.subr.bf16.mxu0 0
  %296 = vmatpush1.bf16.msra.mxu0 0
  %297 = vmatprep.subr.bf16.mxu0 0
  %298 = vmatpush1.bf16.msra.mxu0 0
  %299 = vmatprep.subr.bf16.mxu0 0
  %300 = vmatpush1.bf16.msra.mxu0 0
  %301 = vmatprep.subr.bf16.mxu0 0
  %302 = vmatpush1.bf16.msra.mxu0 0
  %303 = vmatprep.subr.bf16.mxu0 0
  %304 = vmatpush1.bf16.msra.mxu0 0
  %305 = vmatprep.subr.bf16.mxu0 0
  %306 = vmatpush1.bf16.msra.mxu0 0
  %307 = vmatprep.subr.bf16.mxu0 0
  %308 = vmatpush1.bf16.msra.mxu0 0
  %309 = vmatprep.subr.bf16.mxu0 0
  %310 = vmatpush1.bf16.msra.mxu0 0
  %311 = vmatprep.subr.bf16.mxu0 0
  %312 = vmatpush1.bf16.msra.mxu0 0
  %313 = vmatprep.subr.bf16.mxu0 0
  %314 = vmatpush1.bf16.msra.mxu0 0
  %315 = vmatprep.subr.bf16.mxu0 0
  %316 = vmatpush1.bf16.msra.mxu0 0
  %317 = vmatprep.subr.bf16.mxu0 0
  %318 = vmatpush1.bf16.msra.mxu0 0
  %319 = vmatprep.mubr.bf16.mxu0 0
  %320 = vmatmul.mubr.bf16.gmra.mrb[0].mxu0 %v285
  %v321 = vpop.f32.mrb[0].mxu0
  %v322 = vadd.f32 0.0, %v321
  %v323 = vpop.f32.mrb[0].mxu0
  %v324 = vpop.f32.mrb[0].mxu0
  %v325 = vpop.f32.mrb[0].mxu0
  %326 = vdwg.mxu0
  %v327 = vadd.f32 %v282, %v322
  %v328 = vxor.u32 %v327, 2147483648
  %v329 = vmul.f32 %v328, 1.442695
  %v330 = vpow.pop %v329
  %v331 = vadd.f32 %v330, 1.0
  %v332 = vrcp.pop %v331
  %v333 = vmul.f32 1.0, %v332
  %v334 = vtanh.pop %v327
  %v335 = vmul.f32 %v333, 0.0
  %337 = vrot.lane.b32.xlu0 %v334, 64
  %v338 = vpop.permute.xlu0 %337
  %v340 = vmul.f32 %v333, %v338
  %342 = vrot.lane.b32.xlu0 %v340, 32
  %v343 = vpop.permute.xlu0 %342
  %v345 = vadd.f32 %v335, %v343
  %v346 = vtanh.pop %v345
  %348 = vrot.lane.b32.xlu0 %v346, 64
  %v349 = vpop.permute.xlu0 %348
  %v351 = vmul.f32 %v333, %v349
  %353 = vrot.lane.b32.xlu0 %v351, 32
  %v354 = vpop.permute.xlu0 %353
  %vm356 = vcmask 254976
  %357 = vst.msk [vmem:[#allocation3] sm:$0x3] %vm356, %v354
  %v359 = vlaneseq
  %v360 = vshrl.u32 %v359, 7
  %v361 = vsub.s32 0, %v360
  %v362 = vrot.slane %v280, %v361
  %363 = vrot.lane.b32.xlu0 %v362, 96
  %v364 = vpop.permute.xlu0 %363
  %v366 = vmul.f32 %v351, %v364
  %368 = vrot.lane.b32.xlu0 %v366, 32
  %v369 = vpop.permute.xlu0 %368
  %v371 = vsel %vm356, %v369, 0.0
  %372 = vadd.xlane.f32.xlu0 %v371
  %v373 = vpop.xlane.xlu0 %372
  %v375 = vlaneseq
  %v376 = vshrl.u32 %v375, 7
  %v377 = vsub.s32 0, %v376
  %v378 = vrot.slane %v281, %v377
  %v380 = vadd.f32 %v373, %v378
  %s381 = scalar_lea.vmem [#allocation2], 2
  %v382 = vld [vmem:[%s381] sm:$0x3]
  %v383 = vpack.c.bf16 %v351, %v351
  %385 = vrot.lane.b32.xlu0 %v383, 32
  %v386 = vpop.permute.xlu0 %385
  %v388 = vsel %vm283, %v386, 0
  %390 = vmatprep.subr.bf16.mxu0 0
  %391 = vmatpush1.bf16.msra.mxu0 %v278
  %392 = vmatprep.subr.bf16.mxu0 0
  %393 = vmatpush1.bf16.msra.mxu0 %v279
  %394 = vmatprep.subr.bf16.mxu0 0
  %395 = vmatpush1.bf16.msra.mxu0 0
  %396 = vmatprep.subr.bf16.mxu0 0
  %397 = vmatpush1.bf16.msra.mxu0 0
  %398 = vmatprep.subr.bf16.mxu0 0
  %399 = vmatpush1.bf16.msra.mxu0 0
  %400 = vmatprep.subr.bf16.mxu0 0
  %401 = vmatpush1.bf16.msra.mxu0 0
  %402 = vmatprep.subr.bf16.mxu0 0
  %403 = vmatpush1.bf16.msra.mxu0 0
  %404 = vmatprep.subr.bf16.mxu0 0
  %405 = vmatpush1.bf16.msra.mxu0 0
  %406 = vmatprep.subr.bf16.mxu0 0
  %407 = vmatpush1.bf16.msra.mxu0 0
  %408 = vmatprep.subr.bf16.mxu0 0
  %409 = vmatpush1.bf16.msra.mxu0 0
  %410 = vmatprep.subr.bf16.mxu0 0
  %411 = vmatpush1.bf16.msra.mxu0 0
  %412 = vmatprep.subr.bf16.mxu0 0
  %413 = vmatpush1.bf16.msra.mxu0 0
  %414 = vmatprep.subr.bf16.mxu0 0
  %415 = vmatpush1.bf16.msra.mxu0 0
  %416 = vmatprep.subr.bf16.mxu0 0
  %417 = vmatpush1.bf16.msra.mxu0 0
  %418 = vmatprep.subr.bf16.mxu0 0
  %419 = vmatpush1.bf16.msra.mxu0 0
  %420 = vmatprep.subr.bf16.mxu0 0
  %421 = vmatpush1.bf16.msra.mxu0 0
  %422 = vmatprep.mubr.bf16.mxu0 0
  %423 = vmatmul.mubr.bf16.gmra.mrb[0].mxu0 %v388
  %v424 = vpop.f32.mrb[0].mxu0
  %v425 = vadd.f32 0.0, %v424
  %v426 = vpop.f32.mrb[0].mxu0
  %v427 = vpop.f32.mrb[0].mxu0
  %v428 = vpop.f32.mrb[0].mxu0
  %429 = vdwg.mxu0
  %v430 = vadd.f32 %v382, %v425
  %v431 = vxor.u32 %v430, 2147483648
  %v432 = vmul.f32 %v431, 1.442695
  %v433 = vpow.pop %v432
  %v434 = vadd.f32 %v433, 1.0
  %v435 = vrcp.pop %v434
  %v436 = vmul.f32 1.0, %v435
  %v437 = vtanh.pop %v430
  %v438 = vmul.f32 %v436, %v345
  %440 = vrot.lane.b32.xlu0 %v437, 64
  %v441 = vpop.permute.xlu0 %440
  %v443 = vmul.f32 %v436, %v441
  %445 = vrot.lane.b32.xlu0 %v443, 32
  %v446 = vpop.permute.xlu0 %445
  %v448 = vadd.f32 %v438, %v446
  %v449 = vtanh.pop %v448
  %451 = vrot.lane.b32.xlu0 %v449, 64
  %v452 = vpop.permute.xlu0 %451
  %v454 = vmul.f32 %v436, %v452
  %456 = vrot.lane.b32.xlu0 %v454, 32
  %v457 = vpop.permute.xlu0 %456
  %s459 = scalar_lea.vmem [#allocation3], 2
  %460 = vst.msk [vmem:[%s459] sm:$0x3] %vm356, %v457
  %v461 = vmul.f32 %v454, %v364
  %463 = vrot.lane.b32.xlu0 %v461, 32
  %v464 = vpop.permute.xlu0 %463
  %v466 = vsel %vm356, %v464, 0.0
  %467 = vadd.xlane.f32.xlu0 %v466
  %v468 = vpop.xlane.xlu0 %467
  %v469 = vadd.f32 %v468, %v378
  %s470 = scalar_lea.vmem [#allocation2], 4
  %v471 = vld [vmem:[%s470] sm:$0x3]
  %v472 = vpack.c.bf16 %v454, %v454
  %474 = vrot.lane.b32.xlu0 %v472, 32
  %v475 = vpop.permute.xlu0 %474
  %v477 = vsel %vm283, %v475, 0
  %479 = vmatprep.subr.bf16.mxu0 0
  %480 = vmatpush1.bf16.msra.mxu0 %v278
  %481 = vmatprep.subr.bf16.mxu0 0
  %482 = vmatpush1.bf16.msra.mxu0 %v279
  %483 = vmatprep.subr.bf16.mxu0 0
  %484 = vmatpush1.bf16.msra.mxu0 0
  %485 = vmatprep.subr.bf16.mxu0 0
  %486 = vmatpush1.bf16.msra.mxu0 0
  %487 = vmatprep.subr.bf16.mxu0 0
  %488 = vmatpush1.bf16.msra.mxu0 0
  %489 = vmatprep.subr.bf16.mxu0 0
  %490 = vmatpush1.bf16.msra.mxu0 0
  %491 = vmatprep.subr.bf16.mxu0 0
  %492 = vmatpush1.bf16.msra.mxu0 0
  %493 = vmatprep.subr.bf16.mxu0 0
  %494 = vmatpush1.bf16.msra.mxu0 0
  %495 = vmatprep.subr.bf16.mxu0 0
  %496 = vmatpush1.bf16.msra.mxu0 0
  %497 = vmatprep.subr.bf16.mxu0 0
  %498 = vmatpush1.bf16.msra.mxu0 0
  %499 = vmatprep.subr.bf16.mxu0 0
  %500 = vmatpush1.bf16.msra.mxu0 0
  %501 = vmatprep.subr.bf16.mxu0 0
  %502 = vmatpush1.bf16.msra.mxu0 0
  %503 = vmatprep.subr.bf16.mxu0 0
  %504 = vmatpush1.bf16.msra.mxu0 0
  %505 = vmatprep.subr.bf16.mxu0 0
  %506 = vmatpush1.bf16.msra.mxu0 0
  %507 = vmatprep.subr.bf16.mxu0 0
  %508 = vmatpush1.bf16.msra.mxu0 0
  %509 = vmatprep.subr.bf16.mxu0 0
  %510 = vmatpush1.bf16.msra.mxu0 0
  %511 = vmatprep.mubr.bf16.mxu0 0
  %512 = vmatmul.mubr.bf16.gmra.mrb[0].mxu0 %v477
  %v513 = vpop.f32.mrb[0].mxu0
  %v514 = vadd.f32 0.0, %v513
  %v515 = vpop.f32.mrb[0].mxu0
  %v516 = vpop.f32.mrb[0].mxu0
  %v517 = vpop.f32.mrb[0].mxu0
  %518 = vdwg.mxu0
  %v519 = vadd.f32 %v471, %v514
  %v520 = vxor.u32 %v519, 2147483648
  %v521 = vmul.f32 %v520, 1.442695
  %v522 = vpow.pop %v521
  %v523 = vadd.f32 %v522, 1.0
  %v524 = vrcp.pop %v523
  %v525 = vmul.f32 1.0, %v524
  %v526 = vtanh.pop %v519
  %v527 = vmul.f32 %v525, %v448
  %529 = vrot.lane.b32.xlu0 %v526, 64
  %v530 = vpop.permute.xlu0 %529
  %v532 = vmul.f32 %v525, %v530
  %534 = vrot.lane.b32.xlu0 %v532, 32
  %v535 = vpop.permute.xlu0 %534
  %v537 = vadd.f32 %v527, %v535
  %v538 = vtanh.pop %v537
  %540 = vrot.lane.b32.xlu0 %v538, 64
  %v541 = vpop.permute.xlu0 %540
  %v543 = vmul.f32 %v525, %v541
  %545 = vrot.lane.b32.xlu0 %v543, 32
  %v546 = vpop.permute.xlu0 %545
  %s548 = scalar_lea.vmem [#allocation3], 4
  %549 = vst.msk [vmem:[%s548] sm:$0x3] %vm356, %v546
  %v550 = vmul.f32 %v543, %v364
  %552 = vrot.lane.b32.xlu0 %v550, 32
  %v553 = vpop.permute.xlu0 %552
  %v555 = vsel %vm356, %v553, 0.0
  %556 = vadd.xlane.f32.xlu0 %v555
  %v557 = vpop.xlane.xlu0 %556
  %v558 = vadd.f32 %v557, %v378
  %s559 = scalar_lea.vmem [#allocation2], 6
  %v560 = vld [vmem:[%s559] sm:$0x3]
  %v561 = vpack.c.bf16 %v543, %v543
  %563 = vrot.lane.b32.xlu0 %v561, 32
  %v564 = vpop.permute.xlu0 %563
  %v566 = vsel %vm283, %v564, 0
  %568 = vmatprep.subr.bf16.mxu0 0
  %569 = vmatpush1.bf16.msra.mxu0 %v278
  %570 = vmatprep.subr.bf16.mxu0 0
  %571 = vmatpush1.bf16.msra.mxu0 %v279
  %572 = vmatprep.subr.bf16.mxu0 0
  %573 = vmatpush1.bf16.msra.mxu0 0
  %574 = vmatprep.subr.bf16.mxu0 0
  %575 = vmatpush1.bf16.msra.mxu0 0
  %576 = vmatprep.subr.bf16.mxu0 0
  %577 = vmatpush1.bf16.msra.mxu0 0
  %578 = vmatprep.subr.bf16.mxu0 0
  %579 = vmatpush1.bf16.msra.mxu0 0
  %580 = vmatprep.subr.bf16.mxu0 0
  %581 = vmatpush1.bf16.msra.mxu0 0
  %582 = vmatprep.subr.bf16.mxu0 0
  %583 = vmatpush1.bf16.msra.mxu0 0
  %584 = vmatprep.subr.bf16.mxu0 0
  %585 = vmatpush1.bf16.msra.mxu0 0
  %586 = vmatprep.subr.bf16.mxu0 0
  %587 = vmatpush1.bf16.msra.mxu0 0
  %588 = vmatprep.subr.bf16.mxu0 0
  %589 = vmatpush1.bf16.msra.mxu0 0
  %590 = vmatprep.subr.bf16.mxu0 0
  %591 = vmatpush1.bf16.msra.mxu0 0
  %592 = vmatprep.subr.bf16.mxu0 0
  %593 = vmatpush1.bf16.msra.mxu0 0
  %594 = vmatprep.subr.bf16.mxu0 0
  %595 = vmatpush1.bf16.msra.mxu0 0
  %596 = vmatprep.subr.bf16.mxu0 0
  %597 = vmatpush1.bf16.msra.mxu0 0
  %598 = vmatprep.subr.bf16.mxu0 0
  %599 = vmatpush1.bf16.msra.mxu0 0
  %600 = vmatprep.mubr.bf16.mxu0 0
  %601 = vmatmul.mubr.bf16.gmra.mrb[0].mxu0 %v566
  %v602 = vpop.f32.mrb[0].mxu0
  %v603 = vadd.f32 0.0, %v602
  %v604 = vpop.f32.mrb[0].mxu0
  %v605 = vpop.f32.mrb[0].mxu0
  %v606 = vpop.f32.mrb[0].mxu0
  %607 = vdwg.mxu0
  %v608 = vadd.f32 %v560, %v603
  %v609 = vxor.u32 %v608, 2147483648
  %v610 = vmul.f32 %v609, 1.442695
  %v611 = vpow.pop %v610
  %v612 = vadd.f32 %v611, 1.0
  %v613 = vrcp.pop %v612
  %v614 = vmul.f32 1.0, %v613
  %v615 = vtanh.pop %v608
  %v616 = vmul.f32 %v614, %v537
  %618 = vrot.lane.b32.xlu0 %v615, 64
  %v619 = vpop.permute.xlu0 %618
  %v621 = vmul.f32 %v614, %v619
  %623 = vrot.lane.b32.xlu0 %v621, 32
  %v624 = vpop.permute.xlu0 %623
  %v626 = vadd.f32 %v616, %v624
  %v627 = vtanh.pop %v626
  %629 = vrot.lane.b32.xlu0 %v627, 64
  %v630 = vpop.permute.xlu0 %629
  %v632 = vmul.f32 %v614, %v630
  %634 = vrot.lane.b32.xlu0 %v632, 32
  %v635 = vpop.permute.xlu0 %634
  %s637 = scalar_lea.vmem [#allocation3], 6
  %638 = vst.msk [vmem:[%s637] sm:$0x3] %vm356, %v635
  %v639 = vmul.f32 %v632, %v364
  %641 = vrot.lane.b32.xlu0 %v639, 32
  %v642 = vpop.permute.xlu0 %641
  %v644 = vsel %vm356, %v642, 0.0
  %645 = vadd.xlane.f32.xlu0 %v644
  %v646 = vpop.xlane.xlu0 %645
  %v647 = vadd.f32 %v646, %v378
  %s648 = scalar_lea.vmem [#allocation2], 8
  %v649 = vld [vmem:[%s648] sm:$0x3]
  %v650 = vpack.c.bf16 %v632, %v632
  %652 = vrot.lane.b32.xlu0 %v650, 32
  %v653 = vpop.permute.xlu0 %652
  %v655 = vsel %vm283, %v653, 0
  %657 = vmatprep.subr.bf16.mxu0 0
  %658 = vmatpush1.bf16.msra.mxu0 %v278
  %659 = vmatprep.subr.bf16.mxu0 0
  %660 = vmatpush1.bf16.msra.mxu0 %v279
  %661 = vmatprep.subr.bf16.mxu0 0
  %662 = vmatpush1.bf16.msra.mxu0 0
  %663 = vmatprep.subr.bf16.mxu0 0
  %664 = vmatpush1.bf16.msra.mxu0 0
  %665 = vmatprep.subr.bf16.mxu0 0
  %666 = vmatpush1.bf16.msra.mxu0 0
  %667 = vmatprep.subr.bf16.mxu0 0
  %668 = vmatpush1.bf16.msra.mxu0 0
  %669 = vmatprep.subr.bf16.mxu0 0
  %670 = vmatpush1.bf16.msra.mxu0 0
  %671 = vmatprep.subr.bf16.mxu0 0
  %672 = vmatpush1.bf16.msra.mxu0 0
  %673 = vmatprep.subr.bf16.mxu0 0
  %674 = vmatpush1.bf16.msra.mxu0 0
  %675 = vmatprep.subr.bf16.mxu0 0
  %676 = vmatpush1.bf16.msra.mxu0 0
  %677 = vmatprep.subr.bf16.mxu0 0
  %678 = vmatpush1.bf16.msra.mxu0 0
  %679 = vmatprep.subr.bf16.mxu0 0
  %680 = vmatpush1.bf16.msra.mxu0 0
  %681 = vmatprep.subr.bf16.mxu0 0
  %682 = vmatpush1.bf16.msra.mxu0 0
  %683 = vmatprep.subr.bf16.mxu0 0
  %684 = vmatpush1.bf16.msra.mxu0 0
  %685 = vmatprep.subr.bf16.mxu0 0
  %686 = vmatpush1.bf16.msra.mxu0 0
  %687 = vmatprep.subr.bf16.mxu0 0
  %688 = vmatpush1.bf16.msra.mxu0 0
  %689 = vmatprep.mubr.bf16.mxu0 0
  %690 = vmatmul.mubr.bf16.gmra.mrb[0].mxu0 %v655
  %v691 = vpop.f32.mrb[0].mxu0
  %v692 = vadd.f32 0.0, %v691
  %v693 = vpop.f32.mrb[0].mxu0
  %v694 = vpop.f32.mrb[0].mxu0
  %v695 = vpop.f32.mrb[0].mxu0
  %696 = vdwg.mxu0
  %v697 = vadd.f32 %v649, %v692
  %v698 = vxor.u32 %v697, 2147483648
  %v699 = vmul.f32 %v698, 1.442695
  %v700 = vpow.pop %v699
  %v701 = vadd.f32 %v700, 1.0
  %v702 = vrcp.pop %v701
  %v703 = vmul.f32 1.0, %v702
  %v704 = vtanh.pop %v697
  %v705 = vmul.f32 %v703, %v626
  %707 = vrot.lane.b32.xlu0 %v704, 64
  %v708 = vpop.permute.xlu0 %707
  %v710 = vmul.f32 %v703, %v708
  %712 = vrot.lane.b32.xlu0 %v710, 32
  %v713 = vpop.permute.xlu0 %712
  %v715 = vadd.f32 %v705, %v713
  %v716 = vtanh.pop %v715
  %718 = vrot.lane.b32.xlu0 %v716, 64
  %v719 = vpop.permute.xlu0 %718
  %v721 = vmul.f32 %v703, %v719
  %723 = vrot.lane.b32.xlu0 %v721, 32
  %v724 = vpop.permute.xlu0 %723
  %s726 = scalar_lea.vmem [#allocation3], 8
  %727 = vst.msk [vmem:[%s726] sm:$0x3] %vm356, %v724
  %v728 = vmul.f32 %v721, %v364
  %730 = vrot.lane.b32.xlu0 %v728, 32
  %v731 = vpop.permute.xlu0 %730
  %v733 = vsel %vm356, %v731, 0.0
  %734 = vadd.xlane.f32.xlu0 %v733
  %v735 = vpop.xlane.xlu0 %734
  %v736 = vadd.f32 %v735, %v378
  %s737 = scalar_lea.vmem [#allocation2], 10
  %v738 = vld [vmem:[%s737] sm:$0x3]
  %v739 = vpack.c.bf16 %v721, %v721
  %741 = vrot.lane.b32.xlu0 %v739, 32
  %v742 = vpop.permute.xlu0 %741
  %v744 = vsel %vm283, %v742, 0
  %746 = vmatprep.subr.bf16.mxu0 0
  %747 = vmatpush1.bf16.msra.mxu0 %v278
  %748 = vmatprep.subr.bf16.mxu0 0
  %749 = vmatpush1.bf16.msra.mxu0 %v279
  %750 = vmatprep.subr.bf16.mxu0 0
  %751 = vmatpush1.bf16.msra.mxu0 0
  %752 = vmatprep.subr.bf16.mxu0 0
  %753 = vmatpush1.bf16.msra.mxu0 0
  %754 = vmatprep.subr.bf16.mxu0 0
  %755 = vmatpush1.bf16.msra.mxu0 0
  %756 = vmatprep.subr.bf16.mxu0 0
  %757 = vmatpush1.bf16.msra.mxu0 0
  %758 = vmatprep.subr.bf16.mxu0 0
  %759 = vmatpush1.bf16.msra.mxu0 0
  %760 = vmatprep.subr.bf16.mxu0 0
  %761 = vmatpush1.bf16.msra.mxu0 0
  %762 = vmatprep.subr.bf16.mxu0 0
  %763 = vmatpush1.bf16.msra.mxu0 0
  %764 = vmatprep.subr.bf16.mxu0 0
  %765 = vmatpush1.bf16.msra.mxu0 0
  %766 = vmatprep.subr.bf16.mxu0 0
  %767 = vmatpush1.bf16.msra.mxu0 0
  %768 = vmatprep.subr.bf16.mxu0 0
  %769 = vmatpush1.bf16.msra.mxu0 0
  %770 = vmatprep.subr.bf16.mxu0 0
  %771 = vmatpush1.bf16.msra.mxu0 0
  %772 = vmatprep.subr.bf16.mxu0 0
  %773 = vmatpush1.bf16.msra.mxu0 0
  %774 = vmatprep.subr.bf16.mxu0 0
  %775 = vmatpush1.bf16.msra.mxu0 0
  %776 = vmatprep.subr.bf16.mxu0 0
  %777 = vmatpush1.bf16.msra.mxu0 0
  %778 = vmatprep.mubr.bf16.mxu0 0
  %779 = vmatmul.mubr.bf16.gmra.mrb[0].mxu0 %v744
  %v780 = vpop.f32.mrb[0].mxu0
  %v781 = vadd.f32 0.0, %v780
  %v782 = vpop.f32.mrb[0].mxu0
  %v783 = vpop.f32.mrb[0].mxu0
  %v784 = vpop.f32.mrb[0].mxu0
  %785 = vdwg.mxu0
  %v786 = vadd.f32 %v738, %v781
  %v787 = vxor.u32 %v786, 2147483648
  %v788 = vmul.f32 %v787, 1.442695
  %v789 = vpow.pop %v788
  %v790 = vadd.f32 %v789, 1.0
  %v791 = vrcp.pop %v790
  %v792 = vmul.f32 1.0, %v791
  %v793 = vtanh.pop %v786
  %v794 = vmul.f32 %v792, %v715
  %796 = vrot.lane.b32.xlu0 %v793, 64
  %v797 = vpop.permute.xlu0 %796
  %v799 = vmul.f32 %v792, %v797
  %801 = vrot.lane.b32.xlu0 %v799, 32
  %v802 = vpop.permute.xlu0 %801
  %v804 = vadd.f32 %v794, %v802
  %v805 = vtanh.pop %v804
  %807 = vrot.lane.b32.xlu0 %v805, 64
  %v808 = vpop.permute.xlu0 %807
  %v810 = vmul.f32 %v792, %v808
  %812 = vrot.lane.b32.xlu0 %v810, 32
  %v813 = vpop.permute.xlu0 %812
  %s815 = scalar_lea.vmem [#allocation3], 10
  %816 = vst.msk [vmem:[%s815] sm:$0x3] %vm356, %v813
  %v817 = vmul.f32 %v810, %v364
  %819 = vrot.lane.b32.xlu0 %v817, 32
  %v820 = vpop.permute.xlu0 %819
  %v822 = vsel %vm356, %v820, 0.0
  %823 = vadd.xlane.f32.xlu0 %v822
  %v824 = vpop.xlane.xlu0 %823
  %v825 = vadd.f32 %v824, %v378
  %s826 = scalar_lea.vmem [#allocation2], 12
  %v827 = vld [vmem:[%s826] sm:$0x3]
  %v828 = vpack.c.bf16 %v810, %v810
  %830 = vrot.lane.b32.xlu0 %v828, 32
  %v831 = vpop.permute.xlu0 %830
  %v833 = vsel %vm283, %v831, 0
  %835 = vmatprep.subr.bf16.mxu0 0
  %836 = vmatpush1.bf16.msra.mxu0 %v278
  %837 = vmatprep.subr.bf16.mxu0 0
  %838 = vmatpush1.bf16.msra.mxu0 %v279
  %839 = vmatprep.subr.bf16.mxu0 0
  %840 = vmatpush1.bf16.msra.mxu0 0
  %841 = vmatprep.subr.bf16.mxu0 0
  %842 = vmatpush1.bf16.msra.mxu0 0
  %843 = vmatprep.subr.bf16.mxu0 0
  %844 = vmatpush1.bf16.msra.mxu0 0
  %845 = vmatprep.subr.bf16.mxu0 0
  %846 = vmatpush1.bf16.msra.mxu0 0
  %847 = vmatprep.subr.bf16.mxu0 0
  %848 = vmatpush1.bf16.msra.mxu0 0
  %849 = vmatprep.subr.bf16.mxu0 0
  %850 = vmatpush1.bf16.msra.mxu0 0
  %851 = vmatprep.subr.bf16.mxu0 0
  %852 = vmatpush1.bf16.msra.mxu0 0
  %853 = vmatprep.subr.bf16.mxu0 0
  %854 = vmatpush1.bf16.msra.mxu0 0
  %855 = vmatprep.subr.bf16.mxu0 0
  %856 = vmatpush1.bf16.msra.mxu0 0
  %857 = vmatprep.subr.bf16.mxu0 0
  %858 = vmatpush1.bf16.msra.mxu0 0
  %859 = vmatprep.subr.bf16.mxu0 0
  %860 = vmatpush1.bf16.msra.mxu0 0
  %861 = vmatprep.subr.bf16.mxu0 0
  %862 = vmatpush1.bf16.msra.mxu0 0
  %863 = vmatprep.subr.bf16.mxu0 0
  %864 = vmatpush1.bf16.msra.mxu0 0
  %865 = vmatprep.subr.bf16.mxu0 0
  %866 = vmatpush1.bf16.msra.mxu0 0
  %867 = vmatprep.mubr.bf16.mxu0 0
  %868 = vmatmul.mubr.bf16.gmra.mrb[0].mxu0 %v833
  %v869 = vpop.f32.mrb[0].mxu0
  %v870 = vadd.f32 0.0, %v869
  %v871 = vpop.f32.mrb[0].mxu0
  %v872 = vpop.f32.mrb[0].mxu0
  %v873 = vpop.f32.mrb[0].mxu0
  %874 = vdwg.mxu0
  %v875 = vadd.f32 %v827, %v870
  %v876 = vxor.u32 %v875, 2147483648
  %v877 = vmul.f32 %v876, 1.442695
  %v878 = vpow.pop %v877
  %v879 = vadd.f32 %v878, 1.0
  %v880 = vrcp.pop %v879
  %v881 = vmul.f32 1.0, %v880
  %v882 = vtanh.pop %v875
  %v883 = vmul.f32 %v881, %v804
  %885 = vrot.lane.b32.xlu0 %v882, 64
  %v886 = vpop.permute.xlu0 %885
  %v888 = vmul.f32 %v881, %v886
  %890 = vrot.lane.b32.xlu0 %v888, 32
  %v891 = vpop.permute.xlu0 %890
  %v893 = vadd.f32 %v883, %v891
  %v894 = vtanh.pop %v893
  %896 = vrot.lane.b32.xlu0 %v894, 64
  %v897 = vpop.permute.xlu0 %896
  %v899 = vmul.f32 %v881, %v897
  %901 = vrot.lane.b32.xlu0 %v899, 32
  %v902 = vpop.permute.xlu0 %901
  %s904 = scalar_lea.vmem [#allocation3], 12
  %905 = vst.msk [vmem:[%s904] sm:$0x3] %vm356, %v902
  %v906 = vmul.f32 %v899, %v364
  %908 = vrot.lane.b32.xlu0 %v906, 32
  %v909 = vpop.permute.xlu0 %908
  %v911 = vsel %vm356, %v909, 0.0
  %912 = vadd.xlane.f32.xlu0 %v911
  %v913 = vpop.xlane.xlu0 %912
  %v914 = vadd.f32 %v913, %v378
  %s915 = scalar_lea.vmem [#allocation2], 14
  %v916 = vld [vmem:[%s915] sm:$0x3]
  %v917 = vpack.c.bf16 %v899, %v899
  %919 = vrot.lane.b32.xlu0 %v917, 32
  %v920 = vpop.permute.xlu0 %919
  %v922 = vsel %vm283, %v920, 0
  %924 = vmatprep.subr.bf16.mxu0 0
  %925 = vmatpush1.bf16.msra.mxu0 %v278
  %926 = vmatprep.subr.bf16.mxu0 0
  %927 = vmatpush1.bf16.msra.mxu0 %v279
  %928 = vmatprep.subr.bf16.mxu0 0
  %929 = vmatpush1.bf16.msra.mxu0 0
  %930 = vmatprep.subr.bf16.mxu0 0
  %931 = vmatpush1.bf16.msra.mxu0 0
  %932 = vmatprep.subr.bf16.mxu0 0
  %933 = vmatpush1.bf16.msra.mxu0 0
  %934 = vmatprep.subr.bf16.mxu0 0
  %935 = vmatpush1.bf16.msra.mxu0 0
  %936 = vmatprep.subr.bf16.mxu0 0
  %937 = vmatpush1.bf16.msra.mxu0 0
  %938 = vmatprep.subr.bf16.mxu0 0
  %939 = vmatpush1.bf16.msra.mxu0 0
  %940 = vmatprep.subr.bf16.mxu0 0
  %941 = vmatpush1.bf16.msra.mxu0 0
  %942 = vmatprep.subr.bf16.mxu0 0
  %943 = vmatpush1.bf16.msra.mxu0 0
  %944 = vmatprep.subr.bf16.mxu0 0
  %945 = vmatpush1.bf16.msra.mxu0 0
  %946 = vmatprep.subr.bf16.mxu0 0
  %947 = vmatpush1.bf16.msra.mxu0 0
  %948 = vmatprep.subr.bf16.mxu0 0
  %949 = vmatpush1.bf16.msra.mxu0 0
  %950 = vmatprep.subr.bf16.mxu0 0
  %951 = vmatpush1.bf16.msra.mxu0 0
  %952 = vmatprep.subr.bf16.mxu0 0
  %953 = vmatpush1.bf16.msra.mxu0 0
  %954 = vmatprep.subr.bf16.mxu0 0
  %955 = vmatpush1.bf16.msra.mxu0 0
  %956 = vmatprep.mubr.bf16.mxu0 0
  %957 = vmatmul.mubr.bf16.gmra.mrb[0].mxu0 %v922
  %v958 = vpop.f32.mrb[0].mxu0
  %v959 = vadd.f32 0.0, %v958
  %v960 = vpop.f32.mrb[0].mxu0
  %v961 = vpop.f32.mrb[0].mxu0
  %v962 = vpop.f32.mrb[0].mxu0
  %963 = vdwg.mxu0
  %v964 = vadd.f32 %v916, %v959
  %v965 = vxor.u32 %v964, 2147483648
  %v966 = vmul.f32 %v965, 1.442695
  %v967 = vpow.pop %v966
  %v968 = vadd.f32 %v967, 1.0
  %v969 = vrcp.pop %v968
  %v970 = vmul.f32 1.0, %v969
  %v971 = vtanh.pop %v964
  %v972 = vmul.f32 %v970, %v893
  %974 = vrot.lane.b32.xlu0 %v971, 64
  %v975 = vpop.permute.xlu0 %974
  %v977 = vmul.f32 %v970, %v975
  %979 = vrot.lane.b32.xlu0 %v977, 32
  %v980 = vpop.permute.xlu0 %979
  %v982 = vadd.f32 %v972, %v980
  %v983 = vtanh.pop %v982
  %985 = vrot.lane.b32.xlu0 %v983, 64
  %v986 = vpop.permute.xlu0 %985
  %v988 = vmul.f32 %v970, %v986
  %990 = vrot.lane.b32.xlu0 %v988, 32
  %v991 = vpop.permute.xlu0 %990
  %s993 = scalar_lea.vmem [#allocation3], 14
  %994 = vst.msk [vmem:[%s993] sm:$0x3] %vm356, %v991
  %v995 = vmul.f32 %v988, %v364
  %997 = vrot.lane.b32.xlu0 %v995, 32
  %v998 = vpop.permute.xlu0 %997
  %v1000 = vsel %vm356, %v998, 0.0
  %1001 = vadd.xlane.f32.xlu0 %v1000
  %v1002 = vpop.xlane.xlu0 %1001
  %v1003 = vadd.f32 %v1002, %v378
  %1005 = vrot.lane.b32.xlu0 %v469, 1
  %v1006 = vpop.permute.xlu0 %1005
  %1009 = vrot.lane.b32.xlu0 %v558, 2
  %v1010 = vpop.permute.xlu0 %1009
  %1013 = vrot.lane.b32.xlu0 %v647, 3
  %v1014 = vpop.permute.xlu0 %1013
  %1017 = vrot.lane.b32.xlu0 %v736, 4
  %v1018 = vpop.permute.xlu0 %1017
  %1021 = vrot.lane.b32.xlu0 %v825, 5
  %v1022 = vpop.permute.xlu0 %1021
  %1025 = vrot.lane.b32.xlu0 %v914, 6
  %v1026 = vpop.permute.xlu0 %1025
  %1029 = vrot.lane.b32.xlu0 %v1003, 7
  %v1030 = vpop.permute.xlu0 %1029
  %vm1032 = vcmask 7168
  %v1033 = vsel %vm1032, %v380, %v1006
  %vm1034 = vcmask 15360
  %v1035 = vsel %vm1034, %v1033, %v1010
  %vm1036 = vcmask 23552
  %v1037 = vsel %vm1036, %v1035, %v1014
  %vm1038 = vcmask 31744
  %v1039 = vsel %vm1038, %v1037, %v1018
  %vm1040 = vcmask 39936
  %v1041 = vsel %vm1040, %v1039, %v1022
  %vm1042 = vcmask 48128
  %v1043 = vsel %vm1042, %v1041, %v1026
  %vm1044 = vcmask 56320
  %v1045 = vsel %vm1044, %v1043, %v1030
  %vm1046 = vcmask 58368
  %v1047 = vsel %vm1046, %v1045, -inf
  %1048 = vmax.xlane.f32.xlu0 %v1047
  %v1049 = vpop.xlane.xlu0 %1048
  %v1050 = vsub.f32 %v1045, %v1049
  %v1051 = vmul.f32 %v1050, 1.442695
  %v1052 = vpow.pop %v1051
  %v1053 = vsel %vm1046, %v1052, 0.0
  %1054 = vadd.xlane.f32.xlu0 %v1053
  %v1055 = vpop.xlane.xlu0 %1054
  %v1056 = vrcp.pop %v1055
  %v1057 = vmul.f32 %v1052, %v1056
  %v1058 = vld [vmem:[#allocation3] sm:$0x3]
  %1060 = vset.pattern.permute.xlu0 0
  %1061 = vperm.xlu0 %1060, %v1057
  %v1062 = vpop.permute.xlu0 %1061
  %v1064 = vmul.f32 %v1062, %v1058
  %v1065 = vld [vmem:[%s459] sm:$0x3]
  %1066 = vset.pattern.permute.xlu0 1
  %1067 = vperm.xlu0 %1066, %v1057
  %v1068 = vpop.permute.xlu0 %1067
  %v1070 = vmul.f32 %v1068, %v1065
  %v1071 = vadd.f32 %v1064, %v1070
  %v1072 = vld [vmem:[%s548] sm:$0x3]
  %1073 = vset.pattern.permute.xlu0 2
  %1074 = vperm.xlu0 %1073, %v1057
  %v1075 = vpop.permute.xlu0 %1074
  %v1077 = vmul.f32 %v1075, %v1072
  %v1078 = vadd.f32 %v1071, %v1077
  %v1079 = vld [vmem:[%s637] sm:$0x3]
  %1080 = vset.pattern.permute.xlu0 3
  %1081 = vperm.xlu0 %1080, %v1057
  %v1082 = vpop.permute.xlu0 %1081
  %v1084 = vmul.f32 %v1082, %v1079
  %v1085 = vadd.f32 %v1078, %v1084
  %v1086 = vld [vmem:[%s726] sm:$0x3]
  %1087 = vset.pattern.permute.xlu0 4
  %1088 = vperm.xlu0 %1087, %v1057
  %v1089 = vpop.permute.xlu0 %1088
  %v1091 = vmul.f32 %v1089, %v1086
  %v1092 = vadd.f32 %v1085, %v1091
  %v1093 = vld [vmem:[%s815] sm:$0x3]
  %1094 = vset.pattern.permute.xlu0 5
  %1095 = vperm.xlu0 %1094, %v1057
  %v1096 = vpop.permute.xlu0 %1095
  %v1098 = vmul.f32 %v1096, %v1093
  %v1099 = vadd.f32 %v1092, %v1098
  %v1100 = vld [vmem:[%s904] sm:$0x3]
  %1101 = vset.pattern.permute.xlu0 6
  %1102 = vperm.xlu0 %1101, %v1057
  %v1103 = vpop.permute.xlu0 %1102
  %v1105 = vmul.f32 %v1103, %v1100
  %v1106 = vadd.f32 %v1099, %v1105
  %v1107 = vld [vmem:[%s993] sm:$0x3]
  %1108 = vset.pattern.permute.xlu0 7
  %1109 = vperm.xlu0 %1108, %v1057
  %v1110 = vpop.permute.xlu0 %1109
  %v1112 = vmul.f32 %v1110, %v1107
  %v1113 = vadd.f32 %v1106, %v1112
  %v1114 = vld [vmem:[%s6] sm:$0xff]
  %v1115 = vld [vmem:[%s6 + $0x8] sm:$0xff]
  %v1116 = vld [vmem:[%s6 + $0x10] sm:$0xff]
  %v1117 = vld [vmem:[%s6 + $0x18] sm:$0xff]
  %v1118 = vld [vmem:[#allocation5] sm:$0x1]
  %v1120 = vlaneseq
  %v1121 = vshrl.u32 %v1120, 7
  %v1122 = vsub.s32 0, %v1121
  %v1123 = vrot.slane %v1118, %v1122
  %v1126 = vsel %vm283, %v1113, 0
  %1128 = vmatprep.subr.mxu0 0.0
  %1129 = vmatpush1.msra.mxu0 %v1114
  %1130 = vmatprep.subr.mxu0 0.0
  %1131 = vmatpush1.msra.mxu0 %v1115
  %1132 = vmatprep.subr.mxu0 0.0
  %1133 = vmatpush1.msra.mxu0 %v1116
  %1134 = vmatprep.subr.mxu0 0.0
  %1135 = vmatpush1.msra.mxu0 %v1117
  %1136 = vmatprep.subr.mxu0 0.0
  %1137 = vmatpush1.msra.mxu0 0.0
  %1138 = vmatprep.subr.mxu0 0.0
  %1139 = vmatpush1.msra.mxu0 0.0
  %1140 = vmatprep.subr.mxu0 0.0
  %1141 = vmatpush1.msra.mxu0 0.0
  %1142 = vmatprep.subr.mxu0 0.0
  %1143 = vmatpush1.msra.mxu0 0.0
  %1144 = vmatprep.subr.mxu0 0.0
  %1145 = vmatpush1.msra.mxu0 0.0
  %1146 = vmatprep.subr.mxu0 0.0
  %1147 = vmatpush1.msra.mxu0 0.0
  %1148 = vmatprep.subr.mxu0 0.0
  %1149 = vmatpush1.msra.mxu0 0.0
  %1150 = vmatprep.subr.mxu0 0.0
  %1151 = vmatpush1.msra.mxu0 0.0
  %1152 = vmatprep.subr.mxu0 0.0
  %1153 = vmatpush1.msra.mxu0 0.0
  %1154 = vmatprep.subr.mxu0 0.0
  %1155 = vmatpush1.msra.mxu0 0.0
  %1156 = vmatprep.subr.mxu0 0.0
  %1157 = vmatpush1.msra.mxu0 0.0
  %1158 = vmatprep.subr.mxu0 0.0
  %1159 = vmatpush1.msra.mxu0 0.0
  %1160 = vmatprep.subr.mxu0 0.0
  %1161 = vmatpush1.msra.mxu0 0.0
  %1162 = vmatprep.subr.mxu0 0.0
  %1163 = vmatpush1.msra.mxu0 0.0
  %1164 = vmatprep.subr.mxu0 0.0
  %1165 = vmatpush1.msra.mxu0 0.0
  %1166 = vmatprep.subr.mxu0 0.0
  %1167 = vmatpush1.msra.mxu0 0.0
  %1168 = vmatprep.subr.mxu0 0.0
  %1169 = vmatpush1.msra.mxu0 0.0
  %1170 = vmatprep.subr.mxu0 0.0
  %1171 = vmatpush1.msra.mxu0 0.0
  %1172 = vmatprep.subr.mxu0 0.0
  %1173 = vmatpush1.msra.mxu0 0.0
  %1174 = vmatprep.subr.mxu0 0.0
  %1175 = vmatpush1.msra.mxu0 0.0
  %1176 = vmatprep.subr.mxu0 0.0
  %1177 = vmatpush1.msra.mxu0 0.0
  %1178 = vmatprep.subr.mxu0 0.0
  %1179 = vmatpush1.msra.mxu0 0.0
  %1180 = vmatprep.subr.mxu0 0.0
  %1181 = vmatpush1.msra.mxu0 0.0
  %1182 = vmatprep.subr.mxu0 0.0
  %1183 = vmatpush1.msra.mxu0 0.0
  %1184 = vmatprep.subr.mxu0 0.0
  %1185 = vmatpush1.msra.mxu0 0.0
  %1186 = vmatprep.subr.mxu0 0.0
  %1187 = vmatpush1.msra.mxu0 0.0
  %1188 = vmatprep.subr.mxu0 0.0
  %1189 = vmatpush1.msra.mxu0 0.0
  %1190 = vmatprep.subr.mxu0 0.0
  %1191 = vmatpush1.msra.mxu0 0.0
  %1192 = vmatprep.mubr.f32.mxu0 0.0
  %1193 = vmatmul.mubr.f32.gmra.mrb[0].mxu0 %v1126
  %v1194 = vpop.f32.mrb[0].mxu0
  %v1195 = vadd.f32 %v1123, %v1194
  %v1196 = vpop.f32.mrb[0].mxu0
  %1197 = vdwg.mxu0
  %1198 = vrot.lane.b32.xlu0 %v1057, 1
  %v1199 = vpop.permute.xlu0 %1198
  %v1201 = vsel %vm1032, %v1195, %v1199
  %vm1202 = vcmask 72704
  %v1203 = vsel %vm1202, %v1201, 0.0
  %1204 = vst [vmem:[%s8] sm:$0x3] %v1203
  // Predicated region
  $region34: #{lstm_with_attention.1} parent=0 // pred_check
    _
  $region35: #{lstm_with_attention.1} parent=0 // pred_check_branch
    %1206 = sbr.rel (0) target = $region37
  $region36: #{lstm_with_attention.1} parent=0 // pred_region
    _
  $region37: #{lstm_with_attention.1} parent=0 // pred_fallthru
    _
  // Predicated region
  $region38: #{lstm_with_attention.1} parent=0 // pred_check
    _
  $region39: #{lstm_with_attention.1} parent=0 // pred_check_branch
    %1208 = sbr.rel (0) target = $region41
  $region40: #{lstm_with_attention.1} parent=0 // pred_region
    _
  $region41: #{lstm_with_attention.1} parent=0 // pred_fallthru
    _

</llo_original>
